<compile_context>
chip_gen: v7x
topology: tpu7x:2x2x1
jax: 0.10.0
libtpu: 0.0.40
codegen_flags: <defaults>
</compile_context>

<pallas_src>
import jax
import jax.numpy as jnp
from jax.experimental import pallas as pl
from jax.experimental.pallas import tpu as pltpu

IN_FEATURES = 31
HIDDEN = 20
OUT_FEATURES = 20

_LANE = 128     # vreg lane width; last dims pad to this in VMEM
_SUBLANE = 8


def _round_up(x, m):
    return (x + m - 1) // m * m


def _mlp_kernel(x_ref, w1_ref, b1_ref, w2_ref, b2_ref, o_ref):
    # One batch tile per grid step; weights/biases are VMEM-resident
    # (constant index_map) across all steps.
    x = x_ref[...]
    h = jnp.dot(x, w1_ref[...], preferred_element_type=jnp.float32)
    h = jnp.maximum(h + b1_ref[...], 0.0)
    # Keep the hidden activation in f32 for the second GEMM: bit-accurate
    # mixed-precision path, and the extra MXU work is fully hidden behind the
    # HBM-bound x/y streams.
    w2 = w2_ref[...].astype(jnp.float32)
    y = jnp.dot(h, w2, preferred_element_type=jnp.float32)
    y = jnp.maximum(y + b2_ref[...], 0.0)
    o_ref[...] = y.astype(o_ref.dtype)


def autoencoder_forward(x, w1, b1, w2, b2, *, block_b=4096, out_dtype=None,
                        x_buffers=None):
    """x: [B, 31]; w1: [31, 20]; b1: [1, 20]; w2: [20, 20]; b2: [1, 20].

    Recommended policy for best wall time: pass x / w1 / w2 in bf16 (the body
    accumulates in f32 and does bias+relu in f32, so only the streams narrow).
    """
    B = x.shape[0]
    out_dtype = x.dtype if out_dtype is None else jnp.dtype(out_dtype)

    # Batch tile selection:
    #  * tiny batches (<= 8*128 rows): single full-extent block (always a
    #    legal block shape, even when B is not a multiple of 8).
    #  * larger batches: biggest tile <= block_b that still yields >= 4 grid
    #    steps, so v7x gets work on both TensorCores and the double-buffered
    #    HBM<->VMEM pipeline actually overlaps DMA with compute.
    if B > _SUBLANE * _LANE:
        tb = min(block_b, _round_up(pl.cdiv(B, 4), _SUBLANE))
    else:
        tb = B
    grid = (pl.cdiv(B, tb),)

    in_itemsize = x.dtype.itemsize
    out_itemsize = out_dtype.itemsize

    # VMEM budget: the streamed x/y tiles are lane-padded to 128 and double-
    # buffered by the pipeline; weights/biases are tiny.  Scoped-VMEM
    # ceilings: v5e 16 MiB default (128 MiB phys), v6e 32/128, v7x 32/64
    # *per TensorCore* -- keep the explicit limit <= 32 MiB so future tile
    # bumps are validated against v7x, not v6e.
    stream_bytes = 2 * tb * _LANE * (in_itemsize + out_itemsize)
    vmem_limit = int(min(max(stream_bytes + (4 << 20), 16 << 20), 32 << 20))

    flops = 2 * B * (IN_FEATURES * HIDDEN + HIDDEN * OUT_FEATURES)
    bytes_accessed = (
        B * IN_FEATURES * in_itemsize
        + B * OUT_FEATURES * out_itemsize
        + w1.size * w1.dtype.itemsize + b1.size * b1.dtype.itemsize
        + w2.size * w2.dtype.itemsize + b2.size * b2.dtype.itemsize)

    x_spec_kwargs = {}
    if x_buffers is not None:
        # Perf-review suggestion: try 3 input buffers to hide DMA issue
        # latency between short grid steps; sweep back down if VMEM-limited.
        x_spec_kwargs["pipeline_mode"] = pl.Buffered(x_buffers)
    x_spec = pl.BlockSpec((tb, IN_FEATURES), lambda i: (i, 0), **x_spec_kwargs)

    return pl.pallas_call(
        _mlp_kernel,
        out_shape=jax.ShapeDtypeStruct((B, OUT_FEATURES), out_dtype),
        grid_spec=pltpu.PrefetchScalarGridSpec(
            num_scalar_prefetch=0,
            grid=grid,
            in_specs=[
                x_spec,
                pl.BlockSpec(w1.shape, lambda i: (0, 0)),
                pl.BlockSpec(b1.shape, lambda i: (0, 0)),
                pl.BlockSpec(w2.shape, lambda i: (0, 0)),
                pl.BlockSpec(b2.shape, lambda i: (0, 0)),
            ],
            out_specs=pl.BlockSpec((tb, OUT_FEATURES), lambda i: (i, 0)),
        ),
        compiler_params=pltpu.CompilerParams(
            dimension_semantics=("parallel",),
            vmem_limit_bytes=vmem_limit),
        cost_estimate=pl.CostEstimate(
            flops=flops, transcendentals=0, bytes_accessed=bytes_accessed),
    )(x, w1, b1, w2, b2)


def init_params(key, dtype=jnp.float32):
    # Deterministic init matching PyTorch Linear shapes (stored as [in, out]).
    k1, k2, k3, k4 = jax.random.split(key, 4)
    in1, out1 = IN_FEATURES, HIDDEN
    in2, out2 = HIDDEN, OUT_FEATURES
    bound1 = 1.0 / jnp.sqrt(in1)
    bound2 = 1.0 / jnp.sqrt(in2)
    w1 = jax.random.uniform(k1, (in1, out1), jnp.float32, -bound1, bound1)
    b1 = jax.random.uniform(k2, (1, out1), jnp.float32, -bound1, bound1)
    w2 = jax.random.uniform(k3, (in2, out2), jnp.float32, -bound2, bound2)
    b2 = jax.random.uniform(k4, (1, out2), jnp.float32, -bound2, bound2)
    return (w1.astype(dtype), b1.astype(jnp.float32),
            w2.astype(dtype), b2.astype(jnp.float32))


def _ref_forward(x, w1, b1, w2, b2):
    h = jnp.maximum(x @ w1 + b1, 0.0)
    return jnp.maximum(h @ w2 + b2, 0.0)


if __name__ == "__main__":
    key = jax.random.PRNGKey(0)
    kx, kp = jax.random.split(key)
    w1, b1, w2, b2 = init_params(kp)

    # B > 8*128 so the tiler splits the batch into >= 4 grid steps
    # (2048 rows -> tb = 512 -> grid = (4,)): exercises the streamed,
    # double-buffered pipeline and the megacore-friendly grid.
    B = 2048
    x = jax.random.normal(kx, (B, IN_FEATURES), jnp.float32)
    ref = _ref_forward(x, w1, b1, w2, b2)

    # f32 streams: exact check against the plain-JAX reference.
    out = jax.block_until_ready(autoencoder_forward(x, w1, b1, w2, b2))
    assert out.shape == (B, OUT_FEATURES)
    assert jnp.allclose(out, ref, atol=1e-5, rtol=1e-5)

    # Recommended default policy for this HBM-bound kernel: bf16 x/y streams
    # and bf16 weights; f32 MXU accumulation + f32 hidden/bias/relu inside.
    out16 = jax.block_until_ready(
        autoencoder_forward(x.astype(jnp.bfloat16), w1.astype(jnp.bfloat16),
                            b1, w2.astype(jnp.bfloat16), b2))
    assert out16.shape == (B, OUT_FEATURES)
    assert out16.dtype == jnp.bfloat16
    assert jnp.allclose(out16.astype(jnp.float32), ref, atol=5e-2, rtol=5e-2)

    # Ragged batch (B not a multiple of the tile): partial trailing block.
    B2 = 1500
    x2 = jax.random.normal(kx, (B2, IN_FEATURES), jnp.float32)
    ref2 = _ref_forward(x2, w1, b1, w2, b2)
    out2 = jax.block_until_ready(autoencoder_forward(x2, w1, b1, w2, b2))
    assert out2.shape == (B2, OUT_FEATURES)
    assert jnp.allclose(out2, ref2, atol=1e-5, rtol=1e-5)

    # Tiny batch (tb == B == 2, not a multiple of 8): full-extent block shape
    # is legal and stays a single grid step.
    out_small = jax.block_until_ready(
        autoencoder_forward(x[:2], w1, b1, w2, b2))
    assert jnp.allclose(out_small, ref[:2], atol=1e-5, rtol=1e-5)

    print("KERNEL_OK")
</pallas_src>

<mosaic_0001>
module attributes {stable_mosaic.version = 11 : i64} {
  func.func @_mlp_kernel(%arg0: i32, %arg1: memref<512x31xf32, #tpu.memory_space<vmem>>, %arg2: memref<31x20xf32, #tpu.memory_space<vmem>>, %arg3: memref<1x20xf32, #tpu.memory_space<vmem>>, %arg4: memref<20x20xf32, #tpu.memory_space<vmem>>, %arg5: memref<1x20xf32, #tpu.memory_space<vmem>>, %arg6: memref<512x20xf32, #tpu.memory_space<vmem>>) attributes {dimension_semantics = [#tpu.dimension_semantics<parallel>], iteration_bounds = array<i64: 4>, scalar_prefetch = 0 : i64, scratch_operands = 0 : i64, tpu.core_type = #tpu.core_type<tc>, window_params = [{transform_indices = @transform_0, window_bounds = array<i64: 512, 31>}, {pipeline_mode = #tpu.pipeline_mode<synchronous>, transform_indices = @transform_1, window_bounds = array<i64: 31, 20>}, {pipeline_mode = #tpu.pipeline_mode<synchronous>, transform_indices = @transform_2, window_bounds = array<i64: 1, 20>}, {pipeline_mode = #tpu.pipeline_mode<synchronous>, transform_indices = @transform_3, window_bounds = array<i64: 20, 20>}, {pipeline_mode = #tpu.pipeline_mode<synchronous>, transform_indices = @transform_4, window_bounds = array<i64: 1, 20>}, {transform_indices = @transform_5, window_bounds = array<i64: 512, 20>}]} {
    %c0 = arith.constant 0 : index
    %c0_0 = arith.constant 0 : index
    %0 = vector.load %arg1[%c0, %c0_0] : memref<512x31xf32, #tpu.memory_space<vmem>>, vector<512x31xf32>
    %c0_1 = arith.constant 0 : index
    %c0_2 = arith.constant 0 : index
    %1 = vector.load %arg2[%c0_1, %c0_2] : memref<31x20xf32, #tpu.memory_space<vmem>>, vector<31x20xf32>
    %cst = arith.constant dense<0.000000e+00> : vector<512x20xf32>
    %2 = tpu.matmul %0, %1, %cst {dimension_numbers = #tpu.dot_dimension_numbers<[1], [0], [0], [1], [0, 0, 1, 1], [], []>} : vector<512x31xf32>, vector<31x20xf32>, vector<512x20xf32> -> vector<512x20xf32>
    %c0_3 = arith.constant 0 : index
    %c0_4 = arith.constant 0 : index
    %3 = vector.load %arg3[%c0_3, %c0_4] : memref<1x20xf32, #tpu.memory_space<vmem>>, vector<1x20xf32>
    %4 = vector.broadcast %3 : vector<1x20xf32> to vector<512x20xf32>
    %5 = arith.addf %2, %4 : vector<512x20xf32>
    %cst_5 = arith.constant 0.000000e+00 : f32
    %6 = vector.broadcast %cst_5 : f32 to vector<512x20xf32>
    %7 = arith.maximumf %5, %6 : vector<512x20xf32>
    %c0_6 = arith.constant 0 : index
    %c0_7 = arith.constant 0 : index
    %8 = vector.load %arg4[%c0_6, %c0_7] : memref<20x20xf32, #tpu.memory_space<vmem>>, vector<20x20xf32>
    %cst_8 = arith.constant dense<0.000000e+00> : vector<512x20xf32>
    %9 = tpu.matmul %7, %8, %cst_8 {dimension_numbers = #tpu.dot_dimension_numbers<[1], [0], [0], [1], [0, 0, 1, 1], [], []>} : vector<512x20xf32>, vector<20x20xf32>, vector<512x20xf32> -> vector<512x20xf32>
    %c0_9 = arith.constant 0 : index
    %c0_10 = arith.constant 0 : index
    %10 = vector.load %arg5[%c0_9, %c0_10] : memref<1x20xf32, #tpu.memory_space<vmem>>, vector<1x20xf32>
    %11 = vector.broadcast %10 : vector<1x20xf32> to vector<512x20xf32>
    %12 = arith.addf %9, %11 : vector<512x20xf32>
    %cst_11 = arith.constant 0.000000e+00 : f32
    %13 = vector.broadcast %cst_11 : f32 to vector<512x20xf32>
    %14 = arith.maximumf %12, %13 : vector<512x20xf32>
    %c0_12 = arith.constant 0 : index
    %c0_13 = arith.constant 0 : index
    %15 = vector.load %arg6[%c0_12, %c0_13] : memref<512x20xf32, #tpu.memory_space<vmem>>, vector<512x20xf32>
    tpu.vector_store %arg6[%c0_12, %c0_13], %14 {strides = array<i32>} : memref<512x20xf32, #tpu.memory_space<vmem>>, vector<512x20xf32>,
    return
  }
  func.func @transform_0(%arg0: i32) -> (i32, i32) {
    %c0_i32 = arith.constant 0 : i32
    %c0_i32_0 = arith.constant 0 : i32
    return %arg0, %c0_i32 : i32, i32
  }
  func.func @transform_1(%arg0: i32) -> (i32, i32) {
    %c0_i32 = arith.constant 0 : i32
    %c0_i32_0 = arith.constant 0 : i32
    %c0_i32_1 = arith.constant 0 : i32
    return %c0_i32, %c0_i32_0 : i32, i32
  }
  func.func @transform_2(%arg0: i32) -> (i32, i32) {
    %c0_i32 = arith.constant 0 : i32
    %c0_i32_0 = arith.constant 0 : i32
    %c0_i32_1 = arith.constant 0 : i32
    return %c0_i32, %c0_i32_0 : i32, i32
  }
  func.func @transform_3(%arg0: i32) -> (i32, i32) {
    %c0_i32 = arith.constant 0 : i32
    %c0_i32_0 = arith.constant 0 : i32
    %c0_i32_1 = arith.constant 0 : i32
    return %c0_i32, %c0_i32_0 : i32, i32
  }
  func.func @transform_4(%arg0: i32) -> (i32, i32) {
    %c0_i32 = arith.constant 0 : i32
    %c0_i32_0 = arith.constant 0 : i32
    %c0_i32_1 = arith.constant 0 : i32
    return %c0_i32, %c0_i32_0 : i32, i32
  }
  func.func @transform_5(%arg0: i32) -> (i32, i32) {
    %c0_i32 = arith.constant 0 : i32
    %c0_i32_0 = arith.constant 0 : i32
    return %arg0, %c0_i32 : i32, i32
  }
}

</mosaic_0001>

<llo_original>
// kernel: tpu_custom_call.1
$region0: #{tpu_custom_call.1}
  #allocation0 [shape = 'u32[]', space=smem, size = 0x4, offset = 0x4, fixed_abs, tag = 'smem constant byte address 0x4 - core index']
  #allocation1 [shape = 'u32[144,128]{1,0:T(1,128)}', space=vmem, size = 0x12000, scoped, tag = 'internal scratch']
  %s0 = inlined_call_operand.vmem [shape: f32[2048,31], index: 0, kind: input, shape index: {}]
  %s1 = inlined_call_operand.vmem [shape: f32[31,20], index: 1, kind: input, shape index: {}]
  %s2 = inlined_call_operand.vmem [shape: f32[1,20], index: 2, kind: input, shape index: {}]
  %s3 = inlined_call_operand.vmem [shape: f32[20,20], index: 3, kind: input, shape index: {}]
  %s4 = inlined_call_operand.vmem [shape: f32[1,20], index: 4, kind: input, shape index: {}]
  %s5 = inlined_call_operand.vmem [shape: f32[2048,20], index: 5, kind: output, shape index: {}]
  %s6 = sld [smem:[#allocation0]]
  $region53: #{tpu_custom_call.1} parent=0
    _
  %s8 = ssub.s32 1, %s6
  %s9 = scalar_select 0, %s8, %s6
  loop: start=0, step=1, limit=6
  $region2: #{tpu_custom_call.1} parent=0 // loop_pre_header
    _
  $region3: #{tpu_custom_call.1} parent=0 // loop_header
    %s11 = sphi 0, %s15
    %p12 = scmp.ge.s32.totalorder %s11, 6
    %s21 = sphi 0, %s23
    %s24 = sphi 0, %s21
    %s25 = sphi 0, %s24
    %s41 = sphi 0, %s25
    %s45 = sphi 0, %s45
    %s47 = sphi 0, %s45
    %s48 = sphi 0, %s47
    %s62 = sphi 0, %s48
    %s66 = sphi 0, %s66
    %s68 = sphi 0, %s66
    %s69 = sphi 0, %s68
    %s83 = sphi 0, %s69
    %s87 = sphi 0, %s87
    %s89 = sphi 0, %s87
    %s90 = sphi 0, %s89
    %s104 = sphi 0, %s90
    %s108 = sphi 0, %s108
    %s110 = sphi 0, %s108
    %s111 = sphi 0, %s110
    %s125 = sphi 0, %s111
    %s131 = sphi 0, %s133
    %s134 = sphi 0, %s131
    %s135 = sphi 0, %s134
    %s151 = sphi 0, %s135
  $region4: #{tpu_custom_call.1} parent=0 // loop_header_branch
    %14 = sbr.rel (%p12) target = $region8
  $region5: #{tpu_custom_call.1} parent=0 // loop_body
    %s16 = ssub.s32 %s11, 1
    %s17 = ssub.s32 %s11, 2
    %s18 = sadd.s32 %s11, 1
    %s19 = ssub.s32 %s11, %s18
    %p20 = scmp.eq.s32.totalorder %s19, 0
    %s22 = sadd.s32 %s21, 1
    %s23 = scalar_select %p20, %s21, %s22
    %p26 = pneg %p20
    %p27 = scmp.eq.s32.totalorder %s11, 3
    %p28 = por %p26, %p27
    %p29 = scmp.ne.s32.totalorder %s21, %s24
    %p30 = scmp.eq.s32.totalorder %s11, 0
    %p31 = por %p29, %p30
    %p32 = scmp.ne.s32.totalorder %s21, %s24
    %p33 = scmp.eq.s32.totalorder %s16, 3
    %p34 = por %p32, %p33
    %p35 = scmp.ne.s32.totalorder %s24, %s25
    %p36 = scmp.eq.s32.totalorder %s16, 0
    %p37 = por %p35, %p36
    %p38 = scmp.ne.s32.totalorder %s24, %s25
    %p39 = scmp.eq.s32.totalorder %s17, 3
    %p40 = por %p38, %p39
    %p42 = scmp.ne.s32.totalorder %s25, %s41
    %p43 = scmp.eq.s32.totalorder %s17, 0
    %p44 = por %p42, %p43
    %s46 = sadd.s32 %s45, 1
    %p49 = scmp.eq.s32.totalorder %s11, 3
    %p50 = scmp.ne.s32.totalorder %s45, %s47
    %p51 = scmp.eq.s32.totalorder %s11, 0
    %p52 = por %p50, %p51
    %p53 = scmp.ne.s32.totalorder %s45, %s47
    %p54 = scmp.eq.s32.totalorder %s16, 3
    %p55 = por %p53, %p54
    %p56 = scmp.ne.s32.totalorder %s47, %s48
    %p57 = scmp.eq.s32.totalorder %s16, 0
    %p58 = por %p56, %p57
    %p59 = scmp.ne.s32.totalorder %s47, %s48
    %p60 = scmp.eq.s32.totalorder %s17, 3
    %p61 = por %p59, %p60
    %p63 = scmp.ne.s32.totalorder %s48, %s62
    %p64 = scmp.eq.s32.totalorder %s17, 0
    %p65 = por %p63, %p64
    %s67 = sadd.s32 %s66, 1
    %p70 = scmp.eq.s32.totalorder %s11, 3
    %p71 = scmp.ne.s32.totalorder %s66, %s68
    %p72 = scmp.eq.s32.totalorder %s11, 0
    %p73 = por %p71, %p72
    %p74 = scmp.ne.s32.totalorder %s66, %s68
    %p75 = scmp.eq.s32.totalorder %s16, 3
    %p76 = por %p74, %p75
    %p77 = scmp.ne.s32.totalorder %s68, %s69
    %p78 = scmp.eq.s32.totalorder %s16, 0
    %p79 = por %p77, %p78
    %p80 = scmp.ne.s32.totalorder %s68, %s69
    %p81 = scmp.eq.s32.totalorder %s17, 3
    %p82 = por %p80, %p81
    %p84 = scmp.ne.s32.totalorder %s69, %s83
    %p85 = scmp.eq.s32.totalorder %s17, 0
    %p86 = por %p84, %p85
    %s88 = sadd.s32 %s87, 1
    %p91 = scmp.eq.s32.totalorder %s11, 3
    %p92 = scmp.ne.s32.totalorder %s87, %s89
    %p93 = scmp.eq.s32.totalorder %s11, 0
    %p94 = por %p92, %p93
    %p95 = scmp.ne.s32.totalorder %s87, %s89
    %p96 = scmp.eq.s32.totalorder %s16, 3
    %p97 = por %p95, %p96
    %p98 = scmp.ne.s32.totalorder %s89, %s90
    %p99 = scmp.eq.s32.totalorder %s16, 0
    %p100 = por %p98, %p99
    %p101 = scmp.ne.s32.totalorder %s89, %s90
    %p102 = scmp.eq.s32.totalorder %s17, 3
    %p103 = por %p101, %p102
    %p105 = scmp.ne.s32.totalorder %s90, %s104
    %p106 = scmp.eq.s32.totalorder %s17, 0
    %p107 = por %p105, %p106
    %s109 = sadd.s32 %s108, 1
    %p112 = scmp.eq.s32.totalorder %s11, 3
    %p113 = scmp.ne.s32.totalorder %s108, %s110
    %p114 = scmp.eq.s32.totalorder %s11, 0
    %p115 = por %p113, %p114
    %p116 = scmp.ne.s32.totalorder %s108, %s110
    %p117 = scmp.eq.s32.totalorder %s16, 3
    %p118 = por %p116, %p117
    %p119 = scmp.ne.s32.totalorder %s110, %s111
    %p120 = scmp.eq.s32.totalorder %s16, 0
    %p121 = por %p119, %p120
    %p122 = scmp.ne.s32.totalorder %s110, %s111
    %p123 = scmp.eq.s32.totalorder %s17, 3
    %p124 = por %p122, %p123
    %p126 = scmp.ne.s32.totalorder %s111, %s125
    %p127 = scmp.eq.s32.totalorder %s17, 0
    %p128 = por %p126, %p127
    %s129 = ssub.s32 %s11, %s18
    %p130 = scmp.eq.s32.totalorder %s129, 0
    %s132 = sadd.s32 %s131, 1
    %s133 = scalar_select %p130, %s131, %s132
    %p136 = pneg %p130
    %p137 = scmp.eq.s32.totalorder %s11, 3
    %p138 = por %p136, %p137
    %p139 = scmp.ne.s32.totalorder %s131, %s134
    %p140 = scmp.eq.s32.totalorder %s11, 0
    %p141 = por %p139, %p140
    %p142 = scmp.ne.s32.totalorder %s131, %s134
    %p143 = scmp.eq.s32.totalorder %s16, 3
    %p144 = por %p142, %p143
    %p145 = scmp.ne.s32.totalorder %s134, %s135
    %p146 = scmp.eq.s32.totalorder %s16, 0
    %p147 = por %p145, %p146
    %p148 = scmp.ne.s32.totalorder %s134, %s135
    %p149 = scmp.eq.s32.totalorder %s17, 3
    %p150 = por %p148, %p149
    %p152 = scmp.ne.s32.totalorder %s135, %s151
    %p153 = scmp.eq.s32.totalorder %s17, 0
    %p154 = por %p152, %p153
    %p155 = scmp.le.s32.totalorder 1, %s11
    %p156 = scmp.lt.s32.totalorder %s11, 5
    %p157 = pnand %p155, %p156
    %p158 = pneg %p157
    // Predicated region
    $region9: #{tpu_custom_call.1} parent=5 // pred_check
      _
    $region10: #{tpu_custom_call.1} parent=5 // pred_check_branch
      %160 = sbr.rel (%p157) target = $region12
    $region11: #{tpu_custom_call.1} parent=5 // pred_region
      %s161 = ssub.s32 %s11, 1
      // Predicated region
      $region13: #{tpu_custom_call.1} parent=11 // pred_check
        %p162 = pneg %p58
      $region14: #{tpu_custom_call.1} parent=11 // pred_check_branch
        %164 = sbr.rel (%p162) target = $region16
      $region15: #{tpu_custom_call.1} parent=11 // pred_region
        _
      $region16: #{tpu_custom_call.1} parent=11 // pred_fallthru
        _
      // Predicated region
      $region17: #{tpu_custom_call.1} parent=11 // pred_check
        %p165 = pneg %p79
      $region18: #{tpu_custom_call.1} parent=11 // pred_check_branch
        %167 = sbr.rel (%p165) target = $region20
      $region19: #{tpu_custom_call.1} parent=11 // pred_region
        _
      $region20: #{tpu_custom_call.1} parent=11 // pred_fallthru
        _
      // Predicated region
      $region21: #{tpu_custom_call.1} parent=11 // pred_check
        %p168 = pneg %p100
      $region22: #{tpu_custom_call.1} parent=11 // pred_check_branch
        %170 = sbr.rel (%p168) target = $region24
      $region23: #{tpu_custom_call.1} parent=11 // pred_region
        _
      $region24: #{tpu_custom_call.1} parent=11 // pred_fallthru
        _
      // Predicated region
      $region25: #{tpu_custom_call.1} parent=11 // pred_check
        %p171 = pneg %p121
      $region26: #{tpu_custom_call.1} parent=11 // pred_check_branch
        %173 = sbr.rel (%p171) target = $region28
      $region27: #{tpu_custom_call.1} parent=11 // pred_region
        _
      $region28: #{tpu_custom_call.1} parent=11 // pred_fallthru
        _
    $region12: #{tpu_custom_call.1} parent=5 // pred_fallthru
      _
    %p174 = scmp.lt.s32.totalorder %s11, 4
    // Predicated region
    $region29: #{tpu_custom_call.1} parent=5 // pred_check
      %p175 = pneg %p174
    $region30: #{tpu_custom_call.1} parent=5 // pred_check_branch
      %177 = sbr.rel (%p175) target = $region32
    $region31: #{tpu_custom_call.1} parent=5 // pred_region
      // Predicated region
      $region33: #{tpu_custom_call.1} parent=31 // pred_check
        %p178 = pneg %p31
      $region34: #{tpu_custom_call.1} parent=31 // pred_check_branch
        %180 = sbr.rel (%p178) target = $region36
      $region35: #{tpu_custom_call.1} parent=31 // pred_region
        %s181 = smul.u32 64, %s11
        %p182 = scmp.lt.s32.totalorder %s181, 255
        %s183 = scalar_select %p182, %s181, 255
        %s184 = smul.addr %s183, 8
        %s185 = scalar_lea.vmem %s0, %s184
        %s186 = smul.u32 64, %s11
      $region36: #{tpu_custom_call.1} parent=31 // pred_fallthru
        _
    $region32: #{tpu_custom_call.1} parent=5 // pred_fallthru
      _
    %p187 = scmp.le.s32.totalorder 1, %s11
    %p188 = scmp.lt.s32.totalorder %s11, 5
    %p189 = pnand %p187, %p188
    %p190 = pneg %p189
    // Predicated region
    $region37: #{tpu_custom_call.1} parent=5 // pred_check
      _
    $region38: #{tpu_custom_call.1} parent=5 // pred_check_branch
      %192 = sbr.rel (%p189) target = $region40
    $region39: #{tpu_custom_call.1} parent=5 // pred_region
      %s193 = ssub.s32 %s11, 1
      %s194 = smul.u32 64, %s16
      %p195 = scmp.lt.s32.totalorder %s194, 255
      %s196 = scalar_select %p195, %s194, 255
      %s197 = smul.addr %s196, 8
      %s198 = scalar_lea.vmem %s0, %s197
      %p199 = pneg %p37
      %p200 = pneg %p34
      %p201 = pneg %p58
      %p202 = pneg %p55
      %p203 = pneg %p79
      %p204 = pneg %p76
      %p205 = pneg %p100
      %p206 = pneg %p97
      %p207 = pneg %p121
      %p208 = pneg %p118
      %p209 = pneg %p147
      %p210 = pneg %p144
      %s211 = smul.u32 64, %s16
      %p212 = scmp.lt.s32.totalorder %s211, 255
      %s213 = scalar_select %p212, %s211, 255
      %s214 = smul.addr %s213, 8
      %s215 = scalar_lea.vmem %s5, %s214
      %s216 = smul.u32 64, %s16
      %p217 = scmp.lt.s32.totalorder %s216, 255
      %s218 = scalar_select %p217, %s216, 255
      %s219 = smul.addr %s218, 8
      %s220 = scalar_lea.vmem %s0, %s219
      %s221 = smul.u32 64, %s16
      %s222 = smul.u32 64, %s16
      %p223 = scmp.lt.s32.totalorder %s222, 255
      %s224 = scalar_select %p223, %s222, 255
      %s225 = smul.addr %s224, 8
      %s226 = scalar_lea.vmem %s5, %s225
      %s227 = smul.u32 64, %s16
      %v228 = vld [vmem:[%s220] sm:$0xff]
      %v229 = vld [vmem:[%s220 + $0x8] sm:$0xff]
      %v230 = vld [vmem:[%s220 + $0x10] sm:$0xff]
      %v231 = vld [vmem:[%s220 + $0x18] sm:$0xff]
      %v232 = vld [vmem:[%s220 + $0x20] sm:$0xff]
      %v233 = vld [vmem:[%s220 + $0x28] sm:$0xff]
      %v234 = vld [vmem:[%s220 + $0x30] sm:$0xff]
      %v235 = vld [vmem:[%s220 + $0x38] sm:$0xff]
      %v236 = vld [vmem:[%s220 + $0x40] sm:$0xff]
      %v237 = vld [vmem:[%s220 + $0x48] sm:$0xff]
      %v238 = vld [vmem:[%s220 + $0x50] sm:$0xff]
      %v239 = vld [vmem:[%s220 + $0x58] sm:$0xff]
      %v240 = vld [vmem:[%s220 + $0x60] sm:$0xff]
      %v241 = vld [vmem:[%s220 + $0x68] sm:$0xff]
      %v242 = vld [vmem:[%s220 + $0x70] sm:$0xff]
      %v243 = vld [vmem:[%s220 + $0x78] sm:$0xff]
      %v244 = vld [vmem:[%s220 + $0x80] sm:$0xff]
      %v245 = vld [vmem:[%s220 + $0x88] sm:$0xff]
      %v246 = vld [vmem:[%s220 + $0x90] sm:$0xff]
      %v247 = vld [vmem:[%s220 + $0x98] sm:$0xff]
      %v248 = vld [vmem:[%s220 + $0xa0] sm:$0xff]
      %v249 = vld [vmem:[%s220 + $0xa8] sm:$0xff]
      %v250 = vld [vmem:[%s220 + $0xb0] sm:$0xff]
      %v251 = vld [vmem:[%s220 + $0xb8] sm:$0xff]
      %v252 = vld [vmem:[%s220 + $0xc0] sm:$0xff]
      %v253 = vld [vmem:[%s220 + $0xc8] sm:$0xff]
      %v254 = vld [vmem:[%s220 + $0xd0] sm:$0xff]
      %v255 = vld [vmem:[%s220 + $0xd8] sm:$0xff]
      %v256 = vld [vmem:[%s220 + $0xe0] sm:$0xff]
      %v257 = vld [vmem:[%s220 + $0xe8] sm:$0xff]
      %v258 = vld [vmem:[%s220 + $0xf0] sm:$0xff]
      %v259 = vld [vmem:[%s220 + $0xf8] sm:$0xff]
      %v260 = vld [vmem:[%s220 + $0x100] sm:$0xff]
      %v261 = vld [vmem:[%s220 + $0x108] sm:$0xff]
      %v262 = vld [vmem:[%s220 + $0x110] sm:$0xff]
      %v263 = vld [vmem:[%s220 + $0x118] sm:$0xff]
      %v264 = vld [vmem:[%s220 + $0x120] sm:$0xff]
      %v265 = vld [vmem:[%s220 + $0x128] sm:$0xff]
      %v266 = vld [vmem:[%s220 + $0x130] sm:$0xff]
      %v267 = vld [vmem:[%s220 + $0x138] sm:$0xff]
      %v268 = vld [vmem:[%s220 + $0x140] sm:$0xff]
      %v269 = vld [vmem:[%s220 + $0x148] sm:$0xff]
      %v270 = vld [vmem:[%s220 + $0x150] sm:$0xff]
      %v271 = vld [vmem:[%s220 + $0x158] sm:$0xff]
      %v272 = vld [vmem:[%s220 + $0x160] sm:$0xff]
      %v273 = vld [vmem:[%s220 + $0x168] sm:$0xff]
      %v274 = vld [vmem:[%s220 + $0x170] sm:$0xff]
      %v275 = vld [vmem:[%s220 + $0x178] sm:$0xff]
      %v276 = vld [vmem:[%s220 + $0x180] sm:$0xff]
      %v277 = vld [vmem:[%s220 + $0x188] sm:$0xff]
      %v278 = vld [vmem:[%s220 + $0x190] sm:$0xff]
      %v279 = vld [vmem:[%s220 + $0x198] sm:$0xff]
      %v280 = vld [vmem:[%s220 + $0x1a0] sm:$0xff]
      %v281 = vld [vmem:[%s220 + $0x1a8] sm:$0xff]
      %v282 = vld [vmem:[%s220 + $0x1b0] sm:$0xff]
      %v283 = vld [vmem:[%s220 + $0x1b8] sm:$0xff]
      %v284 = vld [vmem:[%s220 + $0x1c0] sm:$0xff]
      %v285 = vld [vmem:[%s220 + $0x1c8] sm:$0xff]
      %v286 = vld [vmem:[%s220 + $0x1d0] sm:$0xff]
      %v287 = vld [vmem:[%s220 + $0x1d8] sm:$0xff]
      %v288 = vld [vmem:[%s220 + $0x1e0] sm:$0xff]
      %v289 = vld [vmem:[%s220 + $0x1e8] sm:$0xff]
      %v290 = vld [vmem:[%s220 + $0x1f0] sm:$0xff]
      %v291 = vld [vmem:[%s220 + $0x1f8] sm:$0xff]
      %v292 = vld [vmem:[%s1] sm:$0xff]
      %v293 = vld [vmem:[%s1 + $0x8] sm:$0xff]
      %v294 = vld [vmem:[%s1 + $0x10] sm:$0xff]
      %v295 = vld [vmem:[%s1 + $0x18] sm:$0x7f]
      %v296 = vld [vmem:[%s2] sm:$0x1]
      %v298 = vlaneseq
      %v299 = vshrl.u32 %v298, 7
      %v300 = vsub.s32 0, %v299
      %v301 = vrot.slane %v296, %v300
      %vm303 = vcmask 252928
      %v305 = vsel %vm303, %v228, 0
      %v308 = vsel %vm303, %v229, 0
      %v311 = vsel %vm303, %v230, 0
      %v314 = vsel %vm303, %v231, 0
      %v317 = vsel %vm303, %v232, 0
      %v320 = vsel %vm303, %v233, 0
      %v323 = vsel %vm303, %v234, 0
      %v326 = vsel %vm303, %v235, 0
      %v329 = vsel %vm303, %v236, 0
      %v332 = vsel %vm303, %v237, 0
      %v335 = vsel %vm303, %v238, 0
      %v338 = vsel %vm303, %v239, 0
      %v341 = vsel %vm303, %v240, 0
      %v344 = vsel %vm303, %v241, 0
      %v347 = vsel %vm303, %v242, 0
      %v350 = vsel %vm303, %v243, 0
      %v353 = vsel %vm303, %v244, 0
      %v356 = vsel %vm303, %v245, 0
      %v359 = vsel %vm303, %v246, 0
      %v362 = vsel %vm303, %v247, 0
      %v365 = vsel %vm303, %v248, 0
      %v368 = vsel %vm303, %v249, 0
      %v371 = vsel %vm303, %v250, 0
      %v374 = vsel %vm303, %v251, 0
      %v377 = vsel %vm303, %v252, 0
      %v380 = vsel %vm303, %v253, 0
      %v383 = vsel %vm303, %v254, 0
      %v386 = vsel %vm303, %v255, 0
      %v389 = vsel %vm303, %v256, 0
      %v392 = vsel %vm303, %v257, 0
      %v395 = vsel %vm303, %v258, 0
      %v398 = vsel %vm303, %v259, 0
      %v401 = vsel %vm303, %v260, 0
      %v404 = vsel %vm303, %v261, 0
      %v407 = vsel %vm303, %v262, 0
      %v410 = vsel %vm303, %v263, 0
      %v413 = vsel %vm303, %v264, 0
      %v416 = vsel %vm303, %v265, 0
      %v419 = vsel %vm303, %v266, 0
      %v422 = vsel %vm303, %v267, 0
      %v425 = vsel %vm303, %v268, 0
      %v428 = vsel %vm303, %v269, 0
      %v431 = vsel %vm303, %v270, 0
      %v434 = vsel %vm303, %v271, 0
      %v437 = vsel %vm303, %v272, 0
      %v440 = vsel %vm303, %v273, 0
      %v443 = vsel %vm303, %v274, 0
      %v446 = vsel %vm303, %v275, 0
      %v449 = vsel %vm303, %v276, 0
      %v452 = vsel %vm303, %v277, 0
      %v455 = vsel %vm303, %v278, 0
      %v458 = vsel %vm303, %v279, 0
      %v461 = vsel %vm303, %v280, 0
      %v464 = vsel %vm303, %v281, 0
      %v467 = vsel %vm303, %v282, 0
      %v470 = vsel %vm303, %v283, 0
      %v473 = vsel %vm303, %v284, 0
      %v476 = vsel %vm303, %v285, 0
      %v479 = vsel %vm303, %v286, 0
      %v482 = vsel %vm303, %v287, 0
      %v485 = vsel %vm303, %v288, 0
      %v488 = vsel %vm303, %v289, 0
      %v491 = vsel %vm303, %v290, 0
      %v494 = vsel %vm303, %v291, 0
      %vm496 = vcmask 1046528
      %v498 = vsel %vm496, %v295, 0
      %500 = vmatprep.subr.mxu0 0.0
      %501 = vmatpush1.msra.mxu0 %v292
      %502 = vmatprep.subr.mxu0 0.0
      %503 = vmatpush1.msra.mxu0 %v293
      %504 = vmatprep.subr.mxu0 0.0
      %505 = vmatpush1.msra.mxu0 %v294
      %506 = vmatprep.subr.mxu0 0.0
      %507 = vmatpush1.msra.mxu0 %v498
      %508 = vmatprep.subr.mxu0 0.0
      %509 = vmatpush1.msra.mxu0 0.0
      %510 = vmatprep.subr.mxu0 0.0
      %511 = vmatpush1.msra.mxu0 0.0
      %512 = vmatprep.subr.mxu0 0.0
      %513 = vmatpush1.msra.mxu0 0.0
      %514 = vmatprep.subr.mxu0 0.0
      %515 = vmatpush1.msra.mxu0 0.0
      %516 = vmatprep.subr.mxu0 0.0
      %517 = vmatpush1.msra.mxu0 0.0
      %518 = vmatprep.subr.mxu0 0.0
      %519 = vmatpush1.msra.mxu0 0.0
      %520 = vmatprep.subr.mxu0 0.0
      %521 = vmatpush1.msra.mxu0 0.0
      %522 = vmatprep.subr.mxu0 0.0
      %523 = vmatpush1.msra.mxu0 0.0
      %524 = vmatprep.subr.mxu0 0.0
      %525 = vmatpush1.msra.mxu0 0.0
      %526 = vmatprep.subr.mxu0 0.0
      %527 = vmatpush1.msra.mxu0 0.0
      %528 = vmatprep.subr.mxu0 0.0
      %529 = vmatpush1.msra.mxu0 0.0
      %530 = vmatprep.subr.mxu0 0.0
      %531 = vmatpush1.msra.mxu0 0.0
      %532 = vmatprep.subr.mxu0 0.0
      %533 = vmatpush1.msra.mxu0 0.0
      %534 = vmatprep.subr.mxu0 0.0
      %535 = vmatpush1.msra.mxu0 0.0
      %536 = vmatprep.subr.mxu0 0.0
      %537 = vmatpush1.msra.mxu0 0.0
      %538 = vmatprep.subr.mxu0 0.0
      %539 = vmatpush1.msra.mxu0 0.0
      %540 = vmatprep.subr.mxu0 0.0
      %541 = vmatpush1.msra.mxu0 0.0
      %542 = vmatprep.subr.mxu0 0.0
      %543 = vmatpush1.msra.mxu0 0.0
      %544 = vmatprep.subr.mxu0 0.0
      %545 = vmatpush1.msra.mxu0 0.0
      %546 = vmatprep.subr.mxu0 0.0
      %547 = vmatpush1.msra.mxu0 0.0
      %548 = vmatprep.subr.mxu0 0.0
      %549 = vmatpush1.msra.mxu0 0.0
      %550 = vmatprep.subr.mxu0 0.0
      %551 = vmatpush1.msra.mxu0 0.0
      %552 = vmatprep.subr.mxu0 0.0
      %553 = vmatpush1.msra.mxu0 0.0
      %554 = vmatprep.subr.mxu0 0.0
      %555 = vmatpush1.msra.mxu0 0.0
      %556 = vmatprep.subr.mxu0 0.0
      %557 = vmatpush1.msra.mxu0 0.0
      %558 = vmatprep.subr.mxu0 0.0
      %559 = vmatpush1.msra.mxu0 0.0
      %560 = vmatprep.subr.mxu0 0.0
      %561 = vmatpush1.msra.mxu0 0.0
      %562 = vmatprep.subr.mxu0 0.0
      %563 = vmatpush1.msra.mxu0 0.0
      %564 = vmatprep.mubr.f32.mxu0 0.0
      %565 = vmatmul.mubr.f32.gmra.mrb[0].mxu0 %v305
      %v566 = vpop.f32.mrb[0].mxu0
      %v567 = vadd.f32 %v301, %v566
      %v568 = vpop.f32.mrb[0].mxu0
      %569 = vmatprep.mubr.f32.mxu0 0.0
      %570 = vmatmul.mubr.f32.gmra.mrb[0].mxu0 %v308
      %v571 = vpop.f32.mrb[0].mxu0
      %v572 = vadd.f32 %v301, %v571
      %v573 = vpop.f32.mrb[0].mxu0
      %574 = vmatprep.mubr.f32.mxu0 0.0
      %575 = vmatmul.mubr.f32.gmra.mrb[0].mxu0 %v311
      %v576 = vpop.f32.mrb[0].mxu0
      %v577 = vadd.f32 %v301, %v576
      %v578 = vpop.f32.mrb[0].mxu0
      %579 = vmatprep.mubr.f32.mxu0 0.0
      %580 = vmatmul.mubr.f32.gmra.mrb[0].mxu0 %v314
      %v581 = vpop.f32.mrb[0].mxu0
      %v582 = vadd.f32 %v301, %v581
      %v583 = vpop.f32.mrb[0].mxu0
      %584 = vmatprep.mubr.f32.mxu0 0.0
      %585 = vmatmul.mubr.f32.gmra.mrb[0].mxu0 %v317
      %v586 = vpop.f32.mrb[0].mxu0
      %v587 = vadd.f32 %v301, %v586
      %v588 = vpop.f32.mrb[0].mxu0
      %589 = vmatprep.mubr.f32.mxu0 0.0
      %590 = vmatmul.mubr.f32.gmra.mrb[0].mxu0 %v320
      %v591 = vpop.f32.mrb[0].mxu0
      %v592 = vadd.f32 %v301, %v591
      %v593 = vpop.f32.mrb[0].mxu0
      %594 = vmatprep.mubr.f32.mxu0 0.0
      %595 = vmatmul.mubr.f32.gmra.mrb[0].mxu0 %v323
      %v596 = vpop.f32.mrb[0].mxu0
      %v597 = vadd.f32 %v301, %v596
      %v598 = vpop.f32.mrb[0].mxu0
      %599 = vmatprep.mubr.f32.mxu0 0.0
      %600 = vmatmul.mubr.f32.gmra.mrb[0].mxu0 %v326
      %v601 = vpop.f32.mrb[0].mxu0
      %v602 = vadd.f32 %v301, %v601
      %v603 = vpop.f32.mrb[0].mxu0
      %604 = vmatprep.mubr.f32.mxu0 0.0
      %605 = vmatmul.mubr.f32.gmra.mrb[0].mxu0 %v329
      %v606 = vpop.f32.mrb[0].mxu0
      %v607 = vadd.f32 %v301, %v606
      %v608 = vpop.f32.mrb[0].mxu0
      %609 = vmatprep.mubr.f32.mxu0 0.0
      %610 = vmatmul.mubr.f32.gmra.mrb[0].mxu0 %v332
      %v611 = vpop.f32.mrb[0].mxu0
      %v612 = vadd.f32 %v301, %v611
      %v613 = vpop.f32.mrb[0].mxu0
      %614 = vmatprep.mubr.f32.mxu0 0.0
      %615 = vmatmul.mubr.f32.gmra.mrb[0].mxu0 %v335
      %v616 = vpop.f32.mrb[0].mxu0
      %v617 = vadd.f32 %v301, %v616
      %v618 = vpop.f32.mrb[0].mxu0
      %619 = vmatprep.mubr.f32.mxu0 0.0
      %620 = vmatmul.mubr.f32.gmra.mrb[0].mxu0 %v338
      %v621 = vpop.f32.mrb[0].mxu0
      %v622 = vadd.f32 %v301, %v621
      %v623 = vpop.f32.mrb[0].mxu0
      %624 = vmatprep.mubr.f32.mxu0 0.0
      %625 = vmatmul.mubr.f32.gmra.mrb[0].mxu0 %v341
      %v626 = vpop.f32.mrb[0].mxu0
      %v627 = vadd.f32 %v301, %v626
      %v628 = vpop.f32.mrb[0].mxu0
      %629 = vmatprep.mubr.f32.mxu0 0.0
      %630 = vmatmul.mubr.f32.gmra.mrb[0].mxu0 %v344
      %v631 = vpop.f32.mrb[0].mxu0
      %v632 = vadd.f32 %v301, %v631
      %v633 = vpop.f32.mrb[0].mxu0
      %634 = vmatprep.mubr.f32.mxu0 0.0
      %635 = vmatmul.mubr.f32.gmra.mrb[0].mxu0 %v347
      %v636 = vpop.f32.mrb[0].mxu0
      %v637 = vadd.f32 %v301, %v636
      %v638 = vpop.f32.mrb[0].mxu0
      %639 = vmatprep.mubr.f32.mxu0 0.0
      %640 = vmatmul.mubr.f32.gmra.mrb[0].mxu0 %v350
      %v641 = vpop.f32.mrb[0].mxu0
      %v642 = vadd.f32 %v301, %v641
      %v643 = vpop.f32.mrb[0].mxu0
      %644 = vmatprep.mubr.f32.mxu0 0.0
      %645 = vmatmul.mubr.f32.gmra.mrb[0].mxu0 %v353
      %v646 = vpop.f32.mrb[0].mxu0
      %v647 = vadd.f32 %v301, %v646
      %v648 = vpop.f32.mrb[0].mxu0
      %649 = vmatprep.mubr.f32.mxu0 0.0
      %650 = vmatmul.mubr.f32.gmra.mrb[0].mxu0 %v356
      %v651 = vpop.f32.mrb[0].mxu0
      %v652 = vadd.f32 %v301, %v651
      %v653 = vpop.f32.mrb[0].mxu0
      %654 = vmatprep.mubr.f32.mxu0 0.0
      %655 = vmatmul.mubr.f32.gmra.mrb[0].mxu0 %v359
      %v656 = vpop.f32.mrb[0].mxu0
      %v657 = vadd.f32 %v301, %v656
      %v658 = vpop.f32.mrb[0].mxu0
      %659 = vmatprep.mubr.f32.mxu0 0.0
      %660 = vmatmul.mubr.f32.gmra.mrb[0].mxu0 %v362
      %v661 = vpop.f32.mrb[0].mxu0
      %v662 = vadd.f32 %v301, %v661
      %v663 = vpop.f32.mrb[0].mxu0
      %664 = vmatprep.mubr.f32.mxu0 0.0
      %665 = vmatmul.mubr.f32.gmra.mrb[0].mxu0 %v365
      %v666 = vpop.f32.mrb[0].mxu0
      %v667 = vadd.f32 %v301, %v666
      %v668 = vpop.f32.mrb[0].mxu0
      %669 = vmatprep.mubr.f32.mxu0 0.0
      %670 = vmatmul.mubr.f32.gmra.mrb[0].mxu0 %v368
      %v671 = vpop.f32.mrb[0].mxu0
      %v672 = vadd.f32 %v301, %v671
      %v673 = vpop.f32.mrb[0].mxu0
      %674 = vmatprep.mubr.f32.mxu0 0.0
      %675 = vmatmul.mubr.f32.gmra.mrb[0].mxu0 %v371
      %v676 = vpop.f32.mrb[0].mxu0
      %v677 = vadd.f32 %v301, %v676
      %v678 = vpop.f32.mrb[0].mxu0
      %679 = vmatprep.mubr.f32.mxu0 0.0
      %680 = vmatmul.mubr.f32.gmra.mrb[0].mxu0 %v374
      %v681 = vpop.f32.mrb[0].mxu0
      %v682 = vadd.f32 %v301, %v681
      %v683 = vpop.f32.mrb[0].mxu0
      %684 = vmatprep.mubr.f32.mxu0 0.0
      %685 = vmatmul.mubr.f32.gmra.mrb[0].mxu0 %v377
      %v686 = vpop.f32.mrb[0].mxu0
      %v687 = vadd.f32 %v301, %v686
      %v688 = vpop.f32.mrb[0].mxu0
      %689 = vmatprep.mubr.f32.mxu0 0.0
      %690 = vmatmul.mubr.f32.gmra.mrb[0].mxu0 %v380
      %v691 = vpop.f32.mrb[0].mxu0
      %v692 = vadd.f32 %v301, %v691
      %v693 = vpop.f32.mrb[0].mxu0
      %694 = vmatprep.mubr.f32.mxu0 0.0
      %695 = vmatmul.mubr.f32.gmra.mrb[0].mxu0 %v383
      %v696 = vpop.f32.mrb[0].mxu0
      %v697 = vadd.f32 %v301, %v696
      %v698 = vpop.f32.mrb[0].mxu0
      %699 = vmatprep.mubr.f32.mxu0 0.0
      %700 = vmatmul.mubr.f32.gmra.mrb[0].mxu0 %v386
      %v701 = vpop.f32.mrb[0].mxu0
      %v702 = vadd.f32 %v301, %v701
      %v703 = vpop.f32.mrb[0].mxu0
      %704 = vmatprep.mubr.f32.mxu0 0.0
      %705 = vmatmul.mubr.f32.gmra.mrb[0].mxu0 %v389
      %v706 = vpop.f32.mrb[0].mxu0
      %v707 = vadd.f32 %v301, %v706
      %v708 = vpop.f32.mrb[0].mxu0
      %709 = vmatprep.mubr.f32.mxu0 0.0
      %710 = vmatmul.mubr.f32.gmra.mrb[0].mxu0 %v392
      %v711 = vpop.f32.mrb[0].mxu0
      %v712 = vadd.f32 %v301, %v711
      %v713 = vpop.f32.mrb[0].mxu0
      %714 = vmatprep.mubr.f32.mxu0 0.0
      %715 = vmatmul.mubr.f32.gmra.mrb[0].mxu0 %v395
      %v716 = vpop.f32.mrb[0].mxu0
      %v717 = vadd.f32 %v301, %v716
      %v718 = vpop.f32.mrb[0].mxu0
      %719 = vmatprep.mubr.f32.mxu0 0.0
      %720 = vmatmul.mubr.f32.gmra.mrb[0].mxu0 %v398
      %v721 = vpop.f32.mrb[0].mxu0
      %v722 = vadd.f32 %v301, %v721
      %v723 = vpop.f32.mrb[0].mxu0
      %724 = vmatprep.mubr.f32.mxu0 0.0
      %725 = vmatmul.mubr.f32.gmra.mrb[0].mxu0 %v401
      %v726 = vpop.f32.mrb[0].mxu0
      %v727 = vadd.f32 %v301, %v726
      %v728 = vpop.f32.mrb[0].mxu0
      %729 = vmatprep.mubr.f32.mxu0 0.0
      %730 = vmatmul.mubr.f32.gmra.mrb[0].mxu0 %v404
      %v731 = vpop.f32.mrb[0].mxu0
      %v732 = vadd.f32 %v301, %v731
      %v733 = vpop.f32.mrb[0].mxu0
      %734 = vmatprep.mubr.f32.mxu0 0.0
      %735 = vmatmul.mubr.f32.gmra.mrb[0].mxu0 %v407
      %v736 = vpop.f32.mrb[0].mxu0
      %v737 = vadd.f32 %v301, %v736
      %v738 = vpop.f32.mrb[0].mxu0
      %739 = vmatprep.mubr.f32.mxu0 0.0
      %740 = vmatmul.mubr.f32.gmra.mrb[0].mxu0 %v410
      %v741 = vpop.f32.mrb[0].mxu0
      %v742 = vadd.f32 %v301, %v741
      %v743 = vpop.f32.mrb[0].mxu0
      %744 = vmatprep.mubr.f32.mxu0 0.0
      %745 = vmatmul.mubr.f32.gmra.mrb[0].mxu0 %v413
      %v746 = vpop.f32.mrb[0].mxu0
      %v747 = vadd.f32 %v301, %v746
      %v748 = vpop.f32.mrb[0].mxu0
      %749 = vmatprep.mubr.f32.mxu0 0.0
      %750 = vmatmul.mubr.f32.gmra.mrb[0].mxu0 %v416
      %v751 = vpop.f32.mrb[0].mxu0
      %v752 = vadd.f32 %v301, %v751
      %v753 = vpop.f32.mrb[0].mxu0
      %754 = vmatprep.mubr.f32.mxu0 0.0
      %755 = vmatmul.mubr.f32.gmra.mrb[0].mxu0 %v419
      %v756 = vpop.f32.mrb[0].mxu0
      %v757 = vadd.f32 %v301, %v756
      %v758 = vpop.f32.mrb[0].mxu0
      %759 = vmatprep.mubr.f32.mxu0 0.0
      %760 = vmatmul.mubr.f32.gmra.mrb[0].mxu0 %v422
      %v761 = vpop.f32.mrb[0].mxu0
      %v762 = vadd.f32 %v301, %v761
      %v763 = vpop.f32.mrb[0].mxu0
      %764 = vmatprep.mubr.f32.mxu0 0.0
      %765 = vmatmul.mubr.f32.gmra.mrb[0].mxu0 %v425
      %v766 = vpop.f32.mrb[0].mxu0
      %v767 = vadd.f32 %v301, %v766
      %v768 = vpop.f32.mrb[0].mxu0
      %769 = vmatprep.mubr.f32.mxu0 0.0
      %770 = vmatmul.mubr.f32.gmra.mrb[0].mxu0 %v428
      %v771 = vpop.f32.mrb[0].mxu0
      %v772 = vadd.f32 %v301, %v771
      %v773 = vpop.f32.mrb[0].mxu0
      %774 = vmatprep.mubr.f32.mxu0 0.0
      %775 = vmatmul.mubr.f32.gmra.mrb[0].mxu0 %v431
      %v776 = vpop.f32.mrb[0].mxu0
      %v777 = vadd.f32 %v301, %v776
      %v778 = vpop.f32.mrb[0].mxu0
      %779 = vmatprep.mubr.f32.mxu0 0.0
      %780 = vmatmul.mubr.f32.gmra.mrb[0].mxu0 %v434
      %v781 = vpop.f32.mrb[0].mxu0
      %v782 = vadd.f32 %v301, %v781
      %v783 = vpop.f32.mrb[0].mxu0
      %784 = vmatprep.mubr.f32.mxu0 0.0
      %785 = vmatmul.mubr.f32.gmra.mrb[0].mxu0 %v437
      %v786 = vpop.f32.mrb[0].mxu0
      %v787 = vadd.f32 %v301, %v786
      %v788 = vpop.f32.mrb[0].mxu0
      %789 = vmatprep.mubr.f32.mxu0 0.0
      %790 = vmatmul.mubr.f32.gmra.mrb[0].mxu0 %v440
      %v791 = vpop.f32.mrb[0].mxu0
      %v792 = vadd.f32 %v301, %v791
      %v793 = vpop.f32.mrb[0].mxu0
      %794 = vmatprep.mubr.f32.mxu0 0.0
      %795 = vmatmul.mubr.f32.gmra.mrb[0].mxu0 %v443
      %v796 = vpop.f32.mrb[0].mxu0
      %v797 = vadd.f32 %v301, %v796
      %v798 = vpop.f32.mrb[0].mxu0
      %799 = vmatprep.mubr.f32.mxu0 0.0
      %800 = vmatmul.mubr.f32.gmra.mrb[0].mxu0 %v446
      %v801 = vpop.f32.mrb[0].mxu0
      %v802 = vadd.f32 %v301, %v801
      %v803 = vpop.f32.mrb[0].mxu0
      %804 = vmatprep.mubr.f32.mxu0 0.0
      %805 = vmatmul.mubr.f32.gmra.mrb[0].mxu0 %v449
      %v806 = vpop.f32.mrb[0].mxu0
      %v807 = vadd.f32 %v301, %v806
      %v808 = vpop.f32.mrb[0].mxu0
      %809 = vmatprep.mubr.f32.mxu0 0.0
      %810 = vmatmul.mubr.f32.gmra.mrb[0].mxu0 %v452
      %v811 = vpop.f32.mrb[0].mxu0
      %v812 = vadd.f32 %v301, %v811
      %v813 = vpop.f32.mrb[0].mxu0
      %814 = vmatprep.mubr.f32.mxu0 0.0
      %815 = vmatmul.mubr.f32.gmra.mrb[0].mxu0 %v455
      %v816 = vpop.f32.mrb[0].mxu0
      %v817 = vadd.f32 %v301, %v816
      %v818 = vpop.f32.mrb[0].mxu0
      %819 = vmatprep.mubr.f32.mxu0 0.0
      %820 = vmatmul.mubr.f32.gmra.mrb[0].mxu0 %v458
      %v821 = vpop.f32.mrb[0].mxu0
      %v822 = vadd.f32 %v301, %v821
      %v823 = vpop.f32.mrb[0].mxu0
      %824 = vmatprep.mubr.f32.mxu0 0.0
      %825 = vmatmul.mubr.f32.gmra.mrb[0].mxu0 %v461
      %v826 = vpop.f32.mrb[0].mxu0
      %v827 = vadd.f32 %v301, %v826
      %v828 = vpop.f32.mrb[0].mxu0
      %829 = vmatprep.mubr.f32.mxu0 0.0
      %830 = vmatmul.mubr.f32.gmra.mrb[0].mxu0 %v464
      %v831 = vpop.f32.mrb[0].mxu0
      %v832 = vadd.f32 %v301, %v831
      %v833 = vpop.f32.mrb[0].mxu0
      %834 = vmatprep.mubr.f32.mxu0 0.0
      %835 = vmatmul.mubr.f32.gmra.mrb[0].mxu0 %v467
      %v836 = vpop.f32.mrb[0].mxu0
      %v837 = vadd.f32 %v301, %v836
      %v838 = vpop.f32.mrb[0].mxu0
      %839 = vmatprep.mubr.f32.mxu0 0.0
      %840 = vmatmul.mubr.f32.gmra.mrb[0].mxu0 %v470
      %v841 = vpop.f32.mrb[0].mxu0
      %v842 = vadd.f32 %v301, %v841
      %v843 = vpop.f32.mrb[0].mxu0
      %844 = vmatprep.mubr.f32.mxu0 0.0
      %845 = vmatmul.mubr.f32.gmra.mrb[0].mxu0 %v473
      %v846 = vpop.f32.mrb[0].mxu0
      %v847 = vadd.f32 %v301, %v846
      %v848 = vpop.f32.mrb[0].mxu0
      %849 = vmatprep.mubr.f32.mxu0 0.0
      %850 = vmatmul.mubr.f32.gmra.mrb[0].mxu0 %v476
      %v851 = vpop.f32.mrb[0].mxu0
      %v852 = vadd.f32 %v301, %v851
      %v853 = vpop.f32.mrb[0].mxu0
      %854 = vmatprep.mubr.f32.mxu0 0.0
      %855 = vmatmul.mubr.f32.gmra.mrb[0].mxu0 %v479
      %v856 = vpop.f32.mrb[0].mxu0
      %v857 = vadd.f32 %v301, %v856
      %v858 = vpop.f32.mrb[0].mxu0
      %859 = vmatprep.mubr.f32.mxu0 0.0
      %860 = vmatmul.mubr.f32.gmra.mrb[0].mxu0 %v482
      %v861 = vpop.f32.mrb[0].mxu0
      %v862 = vadd.f32 %v301, %v861
      %v863 = vpop.f32.mrb[0].mxu0
      %864 = vmatprep.mubr.f32.mxu0 0.0
      %865 = vmatmul.mubr.f32.gmra.mrb[0].mxu0 %v485
      %v866 = vpop.f32.mrb[0].mxu0
      %v867 = vadd.f32 %v301, %v866
      %v868 = vpop.f32.mrb[0].mxu0
      %869 = vmatprep.mubr.f32.mxu0 0.0
      %870 = vmatmul.mubr.f32.gmra.mrb[0].mxu0 %v488
      %v871 = vpop.f32.mrb[0].mxu0
      %v872 = vadd.f32 %v301, %v871
      %v873 = vpop.f32.mrb[0].mxu0
      %874 = vmatprep.mubr.f32.mxu0 0.0
      %875 = vmatmul.mubr.f32.gmra.mrb[0].mxu0 %v491
      %v876 = vpop.f32.mrb[0].mxu0
      %v877 = vadd.f32 %v301, %v876
      %v878 = vpop.f32.mrb[0].mxu0
      %879 = vmatprep.mubr.f32.mxu0 0.0
      %880 = vmatmul.mubr.f32.gmra.mrb[0].mxu0 %v494
      %v881 = vpop.f32.mrb[0].mxu0
      %v882 = vadd.f32 %v301, %v881
      %v883 = vpop.f32.mrb[0].mxu0
      %884 = vdwg.mxu0
      %v885 = vmax.f32 %v567, 0.0
      %v886 = vmax.f32 %v572, 0.0
      %v887 = vmax.f32 %v577, 0.0
      %v888 = vmax.f32 %v582, 0.0
      %v889 = vmax.f32 %v587, 0.0
      %v890 = vmax.f32 %v592, 0.0
      %v891 = vmax.f32 %v597, 0.0
      %v892 = vmax.f32 %v602, 0.0
      %v893 = vmax.f32 %v607, 0.0
      %v894 = vmax.f32 %v612, 0.0
      %v895 = vmax.f32 %v617, 0.0
      %v896 = vmax.f32 %v622, 0.0
      %v897 = vmax.f32 %v627, 0.0
      %v898 = vmax.f32 %v632, 0.0
      %v899 = vmax.f32 %v637, 0.0
      %v900 = vmax.f32 %v642, 0.0
      %v901 = vmax.f32 %v647, 0.0
      %v902 = vmax.f32 %v652, 0.0
      %v903 = vmax.f32 %v657, 0.0
      %v904 = vmax.f32 %v662, 0.0
      %v905 = vmax.f32 %v667, 0.0
      %v906 = vmax.f32 %v672, 0.0
      %v907 = vmax.f32 %v677, 0.0
      %v908 = vmax.f32 %v682, 0.0
      %v909 = vmax.f32 %v687, 0.0
      %v910 = vmax.f32 %v692, 0.0
      %v911 = vmax.f32 %v697, 0.0
      %v912 = vmax.f32 %v702, 0.0
      %v913 = vmax.f32 %v707, 0.0
      %v914 = vmax.f32 %v712, 0.0
      %v915 = vmax.f32 %v717, 0.0
      %v916 = vmax.f32 %v722, 0.0
      %v917 = vmax.f32 %v727, 0.0
      %v918 = vmax.f32 %v732, 0.0
      %v919 = vmax.f32 %v737, 0.0
      %v920 = vmax.f32 %v742, 0.0
      %v921 = vmax.f32 %v747, 0.0
      %v922 = vmax.f32 %v752, 0.0
      %v923 = vmax.f32 %v757, 0.0
      %v924 = vmax.f32 %v762, 0.0
      %v925 = vmax.f32 %v767, 0.0
      %v926 = vmax.f32 %v772, 0.0
      %v927 = vmax.f32 %v777, 0.0
      %v928 = vmax.f32 %v782, 0.0
      %v929 = vmax.f32 %v787, 0.0
      %v930 = vmax.f32 %v792, 0.0
      %v931 = vmax.f32 %v797, 0.0
      %v932 = vmax.f32 %v802, 0.0
      %v933 = vmax.f32 %v807, 0.0
      %v934 = vmax.f32 %v812, 0.0
      %v935 = vmax.f32 %v817, 0.0
      %v936 = vmax.f32 %v822, 0.0
      %v937 = vmax.f32 %v827, 0.0
      %v938 = vmax.f32 %v832, 0.0
      %v939 = vmax.f32 %v837, 0.0
      %v940 = vmax.f32 %v842, 0.0
      %v941 = vmax.f32 %v847, 0.0
      %v942 = vmax.f32 %v852, 0.0
      %v943 = vmax.f32 %v857, 0.0
      %v944 = vmax.f32 %v862, 0.0
      %v945 = vmax.f32 %v867, 0.0
      %v946 = vmax.f32 %v872, 0.0
      %v947 = vmax.f32 %v877, 0.0
      %v948 = vmax.f32 %v882, 0.0
      %v949 = vld [vmem:[%s3] sm:$0xff]
      %v950 = vld [vmem:[%s3 + $0x8] sm:$0xff]
      %v951 = vld [vmem:[%s3 + $0x10] sm:$0xf]
      %v952 = vld [vmem:[%s4] sm:$0x1]
      %v954 = vlaneseq
      %v955 = vshrl.u32 %v954, 7
      %v956 = vsub.s32 0, %v955
      %v957 = vrot.slane %v952, %v956
      %vm959 = vcmask 162816
      %v961 = vsel %vm959, %v885, 0
      %v964 = vsel %vm959, %v886, 0
      %v967 = vsel %vm959, %v887, 0
      %v970 = vsel %vm959, %v888, 0
      %v973 = vsel %vm959, %v889, 0
      %v976 = vsel %vm959, %v890, 0
      %v979 = vsel %vm959, %v891, 0
      %v982 = vsel %vm959, %v892, 0
      %v985 = vsel %vm959, %v893, 0
      %v988 = vsel %vm959, %v894, 0
      %v991 = vsel %vm959, %v895, 0
      %v994 = vsel %vm959, %v896, 0
      %v997 = vsel %vm959, %v897, 0
      %v1000 = vsel %vm959, %v898, 0
      %v1003 = vsel %vm959, %v899, 0
      %v1006 = vsel %vm959, %v900, 0
      %v1009 = vsel %vm959, %v901, 0
      %v1012 = vsel %vm959, %v902, 0
      %v1015 = vsel %vm959, %v903, 0
      %v1018 = vsel %vm959, %v904, 0
      %v1021 = vsel %vm959, %v905, 0
      %v1024 = vsel %vm959, %v906, 0
      %v1027 = vsel %vm959, %v907, 0
      %v1030 = vsel %vm959, %v908, 0
      %v1033 = vsel %vm959, %v909, 0
      %v1036 = vsel %vm959, %v910, 0
      %v1039 = vsel %vm959, %v911, 0
      %v1042 = vsel %vm959, %v912, 0
      %v1045 = vsel %vm959, %v913, 0
      %v1048 = vsel %vm959, %v914, 0
      %v1051 = vsel %vm959, %v915, 0
      %v1054 = vsel %vm959, %v916, 0
      %v1057 = vsel %vm959, %v917, 0
      %v1060 = vsel %vm959, %v918, 0
      %v1063 = vsel %vm959, %v919, 0
      %v1066 = vsel %vm959, %v920, 0
      %v1069 = vsel %vm959, %v921, 0
      %v1072 = vsel %vm959, %v922, 0
      %v1075 = vsel %vm959, %v923, 0
      %v1078 = vsel %vm959, %v924, 0
      %v1081 = vsel %vm959, %v925, 0
      %v1084 = vsel %vm959, %v926, 0
      %v1087 = vsel %vm959, %v927, 0
      %v1090 = vsel %vm959, %v928, 0
      %v1093 = vsel %vm959, %v929, 0
      %v1096 = vsel %vm959, %v930, 0
      %v1099 = vsel %vm959, %v931, 0
      %v1102 = vsel %vm959, %v932, 0
      %v1105 = vsel %vm959, %v933, 0
      %v1108 = vsel %vm959, %v934, 0
      %v1111 = vsel %vm959, %v935, 0
      %v1114 = vsel %vm959, %v936, 0
      %v1117 = vsel %vm959, %v937, 0
      %v1120 = vsel %vm959, %v938, 0
      %v1123 = vsel %vm959, %v939, 0
      %v1126 = vsel %vm959, %v940, 0
      %v1129 = vsel %vm959, %v941, 0
      %v1132 = vsel %vm959, %v942, 0
      %v1135 = vsel %vm959, %v943, 0
      %v1138 = vsel %vm959, %v944, 0
      %v1141 = vsel %vm959, %v945, 0
      %v1144 = vsel %vm959, %v946, 0
      %v1147 = vsel %vm959, %v947, 0
      %v1150 = vsel %vm959, %v948, 0
      %vm1152 = vcmask 1043456
      %v1154 = vsel %vm1152, %v951, 0
      %1156 = vmatprep.subr.mxu0 0.0
      %1157 = vmatpush1.msra.mxu0 %v949
      %1158 = vmatprep.subr.mxu0 0.0
      %1159 = vmatpush1.msra.mxu0 %v950
      %1160 = vmatprep.subr.mxu0 0.0
      %1161 = vmatpush1.msra.mxu0 %v1154
      %1162 = vmatprep.subr.mxu0 0.0
      %1163 = vmatpush1.msra.mxu0 0.0
      %1164 = vmatprep.subr.mxu0 0.0
      %1165 = vmatpush1.msra.mxu0 0.0
      %1166 = vmatprep.subr.mxu0 0.0
      %1167 = vmatpush1.msra.mxu0 0.0
      %1168 = vmatprep.subr.mxu0 0.0
      %1169 = vmatpush1.msra.mxu0 0.0
      %1170 = vmatprep.subr.mxu0 0.0
      %1171 = vmatpush1.msra.mxu0 0.0
      %1172 = vmatprep.subr.mxu0 0.0
      %1173 = vmatpush1.msra.mxu0 0.0
      %1174 = vmatprep.subr.mxu0 0.0
      %1175 = vmatpush1.msra.mxu0 0.0
      %1176 = vmatprep.subr.mxu0 0.0
      %1177 = vmatpush1.msra.mxu0 0.0
      %1178 = vmatprep.subr.mxu0 0.0
      %1179 = vmatpush1.msra.mxu0 0.0
      %1180 = vmatprep.subr.mxu0 0.0
      %1181 = vmatpush1.msra.mxu0 0.0
      %1182 = vmatprep.subr.mxu0 0.0
      %1183 = vmatpush1.msra.mxu0 0.0
      %1184 = vmatprep.subr.mxu0 0.0
      %1185 = vmatpush1.msra.mxu0 0.0
      %1186 = vmatprep.subr.mxu0 0.0
      %1187 = vmatpush1.msra.mxu0 0.0
      %1188 = vmatprep.subr.mxu0 0.0
      %1189 = vmatpush1.msra.mxu0 0.0
      %1190 = vmatprep.subr.mxu0 0.0
      %1191 = vmatpush1.msra.mxu0 0.0
      %1192 = vmatprep.subr.mxu0 0.0
      %1193 = vmatpush1.msra.mxu0 0.0
      %1194 = vmatprep.subr.mxu0 0.0
      %1195 = vmatpush1.msra.mxu0 0.0
      %1196 = vmatprep.subr.mxu0 0.0
      %1197 = vmatpush1.msra.mxu0 0.0
      %1198 = vmatprep.subr.mxu0 0.0
      %1199 = vmatpush1.msra.mxu0 0.0
      %1200 = vmatprep.subr.mxu0 0.0
      %1201 = vmatpush1.msra.mxu0 0.0
      %1202 = vmatprep.subr.mxu0 0.0
      %1203 = vmatpush1.msra.mxu0 0.0
      %1204 = vmatprep.subr.mxu0 0.0
      %1205 = vmatpush1.msra.mxu0 0.0
      %1206 = vmatprep.subr.mxu0 0.0
      %1207 = vmatpush1.msra.mxu0 0.0
      %1208 = vmatprep.subr.mxu0 0.0
      %1209 = vmatpush1.msra.mxu0 0.0
      %1210 = vmatprep.subr.mxu0 0.0
      %1211 = vmatpush1.msra.mxu0 0.0
      %1212 = vmatprep.subr.mxu0 0.0
      %1213 = vmatpush1.msra.mxu0 0.0
      %1214 = vmatprep.subr.mxu0 0.0
      %1215 = vmatpush1.msra.mxu0 0.0
      %1216 = vmatprep.subr.mxu0 0.0
      %1217 = vmatpush1.msra.mxu0 0.0
      %1218 = vmatprep.subr.mxu0 0.0
      %1219 = vmatpush1.msra.mxu0 0.0
      %1220 = vmatprep.mubr.f32.mxu0 0.0
      %1221 = vmatmul.mubr.f32.gmra.mrb[0].mxu0 %v961
      %v1222 = vpop.f32.mrb[0].mxu0
      %v1223 = vadd.f32 %v957, %v1222
      %v1224 = vpop.f32.mrb[0].mxu0
      %1225 = vmatprep.mubr.f32.mxu0 0.0
      %1226 = vmatmul.mubr.f32.gmra.mrb[0].mxu0 %v964
      %v1227 = vpop.f32.mrb[0].mxu0
      %v1228 = vadd.f32 %v957, %v1227
      %v1229 = vpop.f32.mrb[0].mxu0
      %1230 = vmatprep.mubr.f32.mxu0 0.0
      %1231 = vmatmul.mubr.f32.gmra.mrb[0].mxu0 %v967
      %v1232 = vpop.f32.mrb[0].mxu0
      %v1233 = vadd.f32 %v957, %v1232
      %v1234 = vpop.f32.mrb[0].mxu0
      %1235 = vmatprep.mubr.f32.mxu0 0.0
      %1236 = vmatmul.mubr.f32.gmra.mrb[0].mxu0 %v970
      %v1237 = vpop.f32.mrb[0].mxu0
      %v1238 = vadd.f32 %v957, %v1237
      %v1239 = vpop.f32.mrb[0].mxu0
      %1240 = vmatprep.mubr.f32.mxu0 0.0
      %1241 = vmatmul.mubr.f32.gmra.mrb[0].mxu0 %v973
      %v1242 = vpop.f32.mrb[0].mxu0
      %v1243 = vadd.f32 %v957, %v1242
      %v1244 = vpop.f32.mrb[0].mxu0
      %1245 = vmatprep.mubr.f32.mxu0 0.0
      %1246 = vmatmul.mubr.f32.gmra.mrb[0].mxu0 %v976
      %v1247 = vpop.f32.mrb[0].mxu0
      %v1248 = vadd.f32 %v957, %v1247
      %v1249 = vpop.f32.mrb[0].mxu0
      %1250 = vmatprep.mubr.f32.mxu0 0.0
      %1251 = vmatmul.mubr.f32.gmra.mrb[0].mxu0 %v979
      %v1252 = vpop.f32.mrb[0].mxu0
      %v1253 = vadd.f32 %v957, %v1252
      %v1254 = vpop.f32.mrb[0].mxu0
      %1255 = vmatprep.mubr.f32.mxu0 0.0
      %1256 = vmatmul.mubr.f32.gmra.mrb[0].mxu0 %v982
      %v1257 = vpop.f32.mrb[0].mxu0
      %v1258 = vadd.f32 %v957, %v1257
      %v1259 = vpop.f32.mrb[0].mxu0
      %1260 = vmatprep.mubr.f32.mxu0 0.0
      %1261 = vmatmul.mubr.f32.gmra.mrb[0].mxu0 %v985
      %v1262 = vpop.f32.mrb[0].mxu0
      %v1263 = vadd.f32 %v957, %v1262
      %v1264 = vpop.f32.mrb[0].mxu0
      %1265 = vmatprep.mubr.f32.mxu0 0.0
      %1266 = vmatmul.mubr.f32.gmra.mrb[0].mxu0 %v988
      %v1267 = vpop.f32.mrb[0].mxu0
      %v1268 = vadd.f32 %v957, %v1267
      %v1269 = vpop.f32.mrb[0].mxu0
      %1270 = vmatprep.mubr.f32.mxu0 0.0
      %1271 = vmatmul.mubr.f32.gmra.mrb[0].mxu0 %v991
      %v1272 = vpop.f32.mrb[0].mxu0
      %v1273 = vadd.f32 %v957, %v1272
      %v1274 = vpop.f32.mrb[0].mxu0
      %1275 = vmatprep.mubr.f32.mxu0 0.0
      %1276 = vmatmul.mubr.f32.gmra.mrb[0].mxu0 %v994
      %v1277 = vpop.f32.mrb[0].mxu0
      %v1278 = vadd.f32 %v957, %v1277
      %v1279 = vpop.f32.mrb[0].mxu0
      %1280 = vmatprep.mubr.f32.mxu0 0.0
      %1281 = vmatmul.mubr.f32.gmra.mrb[0].mxu0 %v997
      %v1282 = vpop.f32.mrb[0].mxu0
      %v1283 = vadd.f32 %v957, %v1282
      %v1284 = vpop.f32.mrb[0].mxu0
      %1285 = vmatprep.mubr.f32.mxu0 0.0
      %1286 = vmatmul.mubr.f32.gmra.mrb[0].mxu0 %v1000
      %v1287 = vpop.f32.mrb[0].mxu0
      %v1288 = vadd.f32 %v957, %v1287
      %v1289 = vpop.f32.mrb[0].mxu0
      %1290 = vmatprep.mubr.f32.mxu0 0.0
      %1291 = vmatmul.mubr.f32.gmra.mrb[0].mxu0 %v1003
      %v1292 = vpop.f32.mrb[0].mxu0
      %v1293 = vadd.f32 %v957, %v1292
      %v1294 = vpop.f32.mrb[0].mxu0
      %1295 = vmatprep.mubr.f32.mxu0 0.0
      %1296 = vmatmul.mubr.f32.gmra.mrb[0].mxu0 %v1006
      %v1297 = vpop.f32.mrb[0].mxu0
      %v1298 = vadd.f32 %v957, %v1297
      %v1299 = vpop.f32.mrb[0].mxu0
      %1300 = vmatprep.mubr.f32.mxu0 0.0
      %1301 = vmatmul.mubr.f32.gmra.mrb[0].mxu0 %v1009
      %v1302 = vpop.f32.mrb[0].mxu0
      %v1303 = vadd.f32 %v957, %v1302
      %v1304 = vpop.f32.mrb[0].mxu0
      %1305 = vmatprep.mubr.f32.mxu0 0.0
      %1306 = vmatmul.mubr.f32.gmra.mrb[0].mxu0 %v1012
      %v1307 = vpop.f32.mrb[0].mxu0
      %v1308 = vadd.f32 %v957, %v1307
      %v1309 = vpop.f32.mrb[0].mxu0
      %1310 = vmatprep.mubr.f32.mxu0 0.0
      %1311 = vmatmul.mubr.f32.gmra.mrb[0].mxu0 %v1015
      %v1312 = vpop.f32.mrb[0].mxu0
      %v1313 = vadd.f32 %v957, %v1312
      %v1314 = vpop.f32.mrb[0].mxu0
      %1315 = vmatprep.mubr.f32.mxu0 0.0
      %1316 = vmatmul.mubr.f32.gmra.mrb[0].mxu0 %v1018
      %v1317 = vpop.f32.mrb[0].mxu0
      %v1318 = vadd.f32 %v957, %v1317
      %v1319 = vpop.f32.mrb[0].mxu0
      %1320 = vmatprep.mubr.f32.mxu0 0.0
      %1321 = vmatmul.mubr.f32.gmra.mrb[0].mxu0 %v1021
      %v1322 = vpop.f32.mrb[0].mxu0
      %v1323 = vadd.f32 %v957, %v1322
      %v1324 = vpop.f32.mrb[0].mxu0
      %1325 = vmatprep.mubr.f32.mxu0 0.0
      %1326 = vmatmul.mubr.f32.gmra.mrb[0].mxu0 %v1024
      %v1327 = vpop.f32.mrb[0].mxu0
      %v1328 = vadd.f32 %v957, %v1327
      %v1329 = vpop.f32.mrb[0].mxu0
      %1330 = vmatprep.mubr.f32.mxu0 0.0
      %1331 = vmatmul.mubr.f32.gmra.mrb[0].mxu0 %v1027
      %v1332 = vpop.f32.mrb[0].mxu0
      %v1333 = vadd.f32 %v957, %v1332
      %v1334 = vpop.f32.mrb[0].mxu0
      %1335 = vmatprep.mubr.f32.mxu0 0.0
      %1336 = vmatmul.mubr.f32.gmra.mrb[0].mxu0 %v1030
      %v1337 = vpop.f32.mrb[0].mxu0
      %v1338 = vadd.f32 %v957, %v1337
      %v1339 = vpop.f32.mrb[0].mxu0
      %1340 = vmatprep.mubr.f32.mxu0 0.0
      %1341 = vmatmul.mubr.f32.gmra.mrb[0].mxu0 %v1033
      %v1342 = vpop.f32.mrb[0].mxu0
      %v1343 = vadd.f32 %v957, %v1342
      %v1344 = vpop.f32.mrb[0].mxu0
      %1345 = vmatprep.mubr.f32.mxu0 0.0
      %1346 = vmatmul.mubr.f32.gmra.mrb[0].mxu0 %v1036
      %v1347 = vpop.f32.mrb[0].mxu0
      %v1348 = vadd.f32 %v957, %v1347
      %v1349 = vpop.f32.mrb[0].mxu0
      %1350 = vmatprep.mubr.f32.mxu0 0.0
      %1351 = vmatmul.mubr.f32.gmra.mrb[0].mxu0 %v1039
      %v1352 = vpop.f32.mrb[0].mxu0
      %v1353 = vadd.f32 %v957, %v1352
      %v1354 = vpop.f32.mrb[0].mxu0
      %1355 = vmatprep.mubr.f32.mxu0 0.0
      %1356 = vmatmul.mubr.f32.gmra.mrb[0].mxu0 %v1042
      %v1357 = vpop.f32.mrb[0].mxu0
      %v1358 = vadd.f32 %v957, %v1357
      %v1359 = vpop.f32.mrb[0].mxu0
      %1360 = vmatprep.mubr.f32.mxu0 0.0
      %1361 = vmatmul.mubr.f32.gmra.mrb[0].mxu0 %v1045
      %v1362 = vpop.f32.mrb[0].mxu0
      %v1363 = vadd.f32 %v957, %v1362
      %v1364 = vpop.f32.mrb[0].mxu0
      %1365 = vmatprep.mubr.f32.mxu0 0.0
      %1366 = vmatmul.mubr.f32.gmra.mrb[0].mxu0 %v1048
      %v1367 = vpop.f32.mrb[0].mxu0
      %v1368 = vadd.f32 %v957, %v1367
      %v1369 = vpop.f32.mrb[0].mxu0
      %1370 = vmatprep.mubr.f32.mxu0 0.0
      %1371 = vmatmul.mubr.f32.gmra.mrb[0].mxu0 %v1051
      %v1372 = vpop.f32.mrb[0].mxu0
      %v1373 = vadd.f32 %v957, %v1372
      %v1374 = vpop.f32.mrb[0].mxu0
      %1375 = vmatprep.mubr.f32.mxu0 0.0
      %1376 = vmatmul.mubr.f32.gmra.mrb[0].mxu0 %v1054
      %v1377 = vpop.f32.mrb[0].mxu0
      %v1378 = vadd.f32 %v957, %v1377
      %v1379 = vpop.f32.mrb[0].mxu0
      %1380 = vmatprep.mubr.f32.mxu0 0.0
      %1381 = vmatmul.mubr.f32.gmra.mrb[0].mxu0 %v1057
      %v1382 = vpop.f32.mrb[0].mxu0
      %v1383 = vadd.f32 %v957, %v1382
      %v1384 = vpop.f32.mrb[0].mxu0
      %1385 = vmatprep.mubr.f32.mxu0 0.0
      %1386 = vmatmul.mubr.f32.gmra.mrb[0].mxu0 %v1060
      %v1387 = vpop.f32.mrb[0].mxu0
      %v1388 = vadd.f32 %v957, %v1387
      %v1389 = vpop.f32.mrb[0].mxu0
      %1390 = vmatprep.mubr.f32.mxu0 0.0
      %1391 = vmatmul.mubr.f32.gmra.mrb[0].mxu0 %v1063
      %v1392 = vpop.f32.mrb[0].mxu0
      %v1393 = vadd.f32 %v957, %v1392
      %v1394 = vpop.f32.mrb[0].mxu0
      %1395 = vmatprep.mubr.f32.mxu0 0.0
      %1396 = vmatmul.mubr.f32.gmra.mrb[0].mxu0 %v1066
      %v1397 = vpop.f32.mrb[0].mxu0
      %v1398 = vadd.f32 %v957, %v1397
      %v1399 = vpop.f32.mrb[0].mxu0
      %1400 = vmatprep.mubr.f32.mxu0 0.0
      %1401 = vmatmul.mubr.f32.gmra.mrb[0].mxu0 %v1069
      %v1402 = vpop.f32.mrb[0].mxu0
      %v1403 = vadd.f32 %v957, %v1402
      %v1404 = vpop.f32.mrb[0].mxu0
      %1405 = vmatprep.mubr.f32.mxu0 0.0
      %1406 = vmatmul.mubr.f32.gmra.mrb[0].mxu0 %v1072
      %v1407 = vpop.f32.mrb[0].mxu0
      %v1408 = vadd.f32 %v957, %v1407
      %v1409 = vpop.f32.mrb[0].mxu0
      %1410 = vmatprep.mubr.f32.mxu0 0.0
      %1411 = vmatmul.mubr.f32.gmra.mrb[0].mxu0 %v1075
      %v1412 = vpop.f32.mrb[0].mxu0
      %v1413 = vadd.f32 %v957, %v1412
      %v1414 = vpop.f32.mrb[0].mxu0
      %1415 = vmatprep.mubr.f32.mxu0 0.0
      %1416 = vmatmul.mubr.f32.gmra.mrb[0].mxu0 %v1078
      %v1417 = vpop.f32.mrb[0].mxu0
      %v1418 = vadd.f32 %v957, %v1417
      %v1419 = vpop.f32.mrb[0].mxu0
      %1420 = vmatprep.mubr.f32.mxu0 0.0
      %1421 = vmatmul.mubr.f32.gmra.mrb[0].mxu0 %v1081
      %v1422 = vpop.f32.mrb[0].mxu0
      %v1423 = vadd.f32 %v957, %v1422
      %v1424 = vpop.f32.mrb[0].mxu0
      %1425 = vmatprep.mubr.f32.mxu0 0.0
      %1426 = vmatmul.mubr.f32.gmra.mrb[0].mxu0 %v1084
      %v1427 = vpop.f32.mrb[0].mxu0
      %v1428 = vadd.f32 %v957, %v1427
      %v1429 = vpop.f32.mrb[0].mxu0
      %1430 = vmatprep.mubr.f32.mxu0 0.0
      %1431 = vmatmul.mubr.f32.gmra.mrb[0].mxu0 %v1087
      %v1432 = vpop.f32.mrb[0].mxu0
      %v1433 = vadd.f32 %v957, %v1432
      %v1434 = vpop.f32.mrb[0].mxu0
      %1435 = vmatprep.mubr.f32.mxu0 0.0
      %1436 = vmatmul.mubr.f32.gmra.mrb[0].mxu0 %v1090
      %v1437 = vpop.f32.mrb[0].mxu0
      %v1438 = vadd.f32 %v957, %v1437
      %v1439 = vpop.f32.mrb[0].mxu0
      %1440 = vmatprep.mubr.f32.mxu0 0.0
      %1441 = vmatmul.mubr.f32.gmra.mrb[0].mxu0 %v1093
      %v1442 = vpop.f32.mrb[0].mxu0
      %v1443 = vadd.f32 %v957, %v1442
      %v1444 = vpop.f32.mrb[0].mxu0
      %1445 = vmatprep.mubr.f32.mxu0 0.0
      %1446 = vmatmul.mubr.f32.gmra.mrb[0].mxu0 %v1096
      %v1447 = vpop.f32.mrb[0].mxu0
      %v1448 = vadd.f32 %v957, %v1447
      %v1449 = vpop.f32.mrb[0].mxu0
      %1450 = vmatprep.mubr.f32.mxu0 0.0
      %1451 = vmatmul.mubr.f32.gmra.mrb[0].mxu0 %v1099
      %v1452 = vpop.f32.mrb[0].mxu0
      %v1453 = vadd.f32 %v957, %v1452
      %v1454 = vpop.f32.mrb[0].mxu0
      %1455 = vmatprep.mubr.f32.mxu0 0.0
      %1456 = vmatmul.mubr.f32.gmra.mrb[0].mxu0 %v1102
      %v1457 = vpop.f32.mrb[0].mxu0
      %v1458 = vadd.f32 %v957, %v1457
      %v1459 = vpop.f32.mrb[0].mxu0
      %1460 = vmatprep.mubr.f32.mxu0 0.0
      %1461 = vmatmul.mubr.f32.gmra.mrb[0].mxu0 %v1105
      %v1462 = vpop.f32.mrb[0].mxu0
      %v1463 = vadd.f32 %v957, %v1462
      %v1464 = vpop.f32.mrb[0].mxu0
      %1465 = vmatprep.mubr.f32.mxu0 0.0
      %1466 = vmatmul.mubr.f32.gmra.mrb[0].mxu0 %v1108
      %v1467 = vpop.f32.mrb[0].mxu0
      %v1468 = vadd.f32 %v957, %v1467
      %v1469 = vpop.f32.mrb[0].mxu0
      %1470 = vmatprep.mubr.f32.mxu0 0.0
      %1471 = vmatmul.mubr.f32.gmra.mrb[0].mxu0 %v1111
      %v1472 = vpop.f32.mrb[0].mxu0
      %v1473 = vadd.f32 %v957, %v1472
      %v1474 = vpop.f32.mrb[0].mxu0
      %1475 = vmatprep.mubr.f32.mxu0 0.0
      %1476 = vmatmul.mubr.f32.gmra.mrb[0].mxu0 %v1114
      %v1477 = vpop.f32.mrb[0].mxu0
      %v1478 = vadd.f32 %v957, %v1477
      %v1479 = vpop.f32.mrb[0].mxu0
      %1480 = vmatprep.mubr.f32.mxu0 0.0
      %1481 = vmatmul.mubr.f32.gmra.mrb[0].mxu0 %v1117
      %v1482 = vpop.f32.mrb[0].mxu0
      %v1483 = vadd.f32 %v957, %v1482
      %v1484 = vpop.f32.mrb[0].mxu0
      %1485 = vmatprep.mubr.f32.mxu0 0.0
      %1486 = vmatmul.mubr.f32.gmra.mrb[0].mxu0 %v1120
      %v1487 = vpop.f32.mrb[0].mxu0
      %v1488 = vadd.f32 %v957, %v1487
      %v1489 = vpop.f32.mrb[0].mxu0
      %1490 = vmatprep.mubr.f32.mxu0 0.0
      %1491 = vmatmul.mubr.f32.gmra.mrb[0].mxu0 %v1123
      %v1492 = vpop.f32.mrb[0].mxu0
      %v1493 = vadd.f32 %v957, %v1492
      %v1494 = vpop.f32.mrb[0].mxu0
      %1495 = vmatprep.mubr.f32.mxu0 0.0
      %1496 = vmatmul.mubr.f32.gmra.mrb[0].mxu0 %v1126
      %v1497 = vpop.f32.mrb[0].mxu0
      %v1498 = vadd.f32 %v957, %v1497
      %v1499 = vpop.f32.mrb[0].mxu0
      %1500 = vmatprep.mubr.f32.mxu0 0.0
      %1501 = vmatmul.mubr.f32.gmra.mrb[0].mxu0 %v1129
      %v1502 = vpop.f32.mrb[0].mxu0
      %v1503 = vadd.f32 %v957, %v1502
      %v1504 = vpop.f32.mrb[0].mxu0
      %1505 = vmatprep.mubr.f32.mxu0 0.0
      %1506 = vmatmul.mubr.f32.gmra.mrb[0].mxu0 %v1132
      %v1507 = vpop.f32.mrb[0].mxu0
      %v1508 = vadd.f32 %v957, %v1507
      %v1509 = vpop.f32.mrb[0].mxu0
      %1510 = vmatprep.mubr.f32.mxu0 0.0
      %1511 = vmatmul.mubr.f32.gmra.mrb[0].mxu0 %v1135
      %v1512 = vpop.f32.mrb[0].mxu0
      %v1513 = vadd.f32 %v957, %v1512
      %v1514 = vpop.f32.mrb[0].mxu0
      %1515 = vmatprep.mubr.f32.mxu0 0.0
      %1516 = vmatmul.mubr.f32.gmra.mrb[0].mxu0 %v1138
      %v1517 = vpop.f32.mrb[0].mxu0
      %v1518 = vadd.f32 %v957, %v1517
      %v1519 = vpop.f32.mrb[0].mxu0
      %1520 = vmatprep.mubr.f32.mxu0 0.0
      %1521 = vmatmul.mubr.f32.gmra.mrb[0].mxu0 %v1141
      %v1522 = vpop.f32.mrb[0].mxu0
      %v1523 = vadd.f32 %v957, %v1522
      %v1524 = vpop.f32.mrb[0].mxu0
      %1525 = vmatprep.mubr.f32.mxu0 0.0
      %1526 = vmatmul.mubr.f32.gmra.mrb[0].mxu0 %v1144
      %v1527 = vpop.f32.mrb[0].mxu0
      %v1528 = vadd.f32 %v957, %v1527
      %v1529 = vpop.f32.mrb[0].mxu0
      %1530 = vmatprep.mubr.f32.mxu0 0.0
      %1531 = vmatmul.mubr.f32.gmra.mrb[0].mxu0 %v1147
      %v1532 = vpop.f32.mrb[0].mxu0
      %v1533 = vadd.f32 %v957, %v1532
      %v1534 = vpop.f32.mrb[0].mxu0
      %1535 = vmatprep.mubr.f32.mxu0 0.0
      %1536 = vmatmul.mubr.f32.gmra.mrb[0].mxu0 %v1150
      %v1537 = vpop.f32.mrb[0].mxu0
      %v1538 = vadd.f32 %v957, %v1537
      %v1539 = vpop.f32.mrb[0].mxu0
      %1540 = vdwg.mxu0
      %v1541 = vmax.f32 %v1223, 0.0
      %v1542 = vmax.f32 %v1228, 0.0
      %v1543 = vmax.f32 %v1233, 0.0
      %v1544 = vmax.f32 %v1238, 0.0
      %v1545 = vmax.f32 %v1243, 0.0
      %v1546 = vmax.f32 %v1248, 0.0
      %v1547 = vmax.f32 %v1253, 0.0
      %v1548 = vmax.f32 %v1258, 0.0
      %v1549 = vmax.f32 %v1263, 0.0
      %v1550 = vmax.f32 %v1268, 0.0
      %v1551 = vmax.f32 %v1273, 0.0
      %v1552 = vmax.f32 %v1278, 0.0
      %v1553 = vmax.f32 %v1283, 0.0
      %v1554 = vmax.f32 %v1288, 0.0
      %v1555 = vmax.f32 %v1293, 0.0
      %v1556 = vmax.f32 %v1298, 0.0
      %v1557 = vmax.f32 %v1303, 0.0
      %v1558 = vmax.f32 %v1308, 0.0
      %v1559 = vmax.f32 %v1313, 0.0
      %v1560 = vmax.f32 %v1318, 0.0
      %v1561 = vmax.f32 %v1323, 0.0
      %v1562 = vmax.f32 %v1328, 0.0
      %v1563 = vmax.f32 %v1333, 0.0
      %v1564 = vmax.f32 %v1338, 0.0
      %v1565 = vmax.f32 %v1343, 0.0
      %v1566 = vmax.f32 %v1348, 0.0
      %v1567 = vmax.f32 %v1353, 0.0
      %v1568 = vmax.f32 %v1358, 0.0
      %v1569 = vmax.f32 %v1363, 0.0
      %v1570 = vmax.f32 %v1368, 0.0
      %v1571 = vmax.f32 %v1373, 0.0
      %v1572 = vmax.f32 %v1378, 0.0
      %v1573 = vmax.f32 %v1383, 0.0
      %v1574 = vmax.f32 %v1388, 0.0
      %v1575 = vmax.f32 %v1393, 0.0
      %v1576 = vmax.f32 %v1398, 0.0
      %v1577 = vmax.f32 %v1403, 0.0
      %v1578 = vmax.f32 %v1408, 0.0
      %v1579 = vmax.f32 %v1413, 0.0
      %v1580 = vmax.f32 %v1418, 0.0
      %v1581 = vmax.f32 %v1423, 0.0
      %v1582 = vmax.f32 %v1428, 0.0
      %v1583 = vmax.f32 %v1433, 0.0
      %v1584 = vmax.f32 %v1438, 0.0
      %v1585 = vmax.f32 %v1443, 0.0
      %v1586 = vmax.f32 %v1448, 0.0
      %v1587 = vmax.f32 %v1453, 0.0
      %v1588 = vmax.f32 %v1458, 0.0
      %v1589 = vmax.f32 %v1463, 0.0
      %v1590 = vmax.f32 %v1468, 0.0
      %v1591 = vmax.f32 %v1473, 0.0
      %v1592 = vmax.f32 %v1478, 0.0
      %v1593 = vmax.f32 %v1483, 0.0
      %v1594 = vmax.f32 %v1488, 0.0
      %v1595 = vmax.f32 %v1493, 0.0
      %v1596 = vmax.f32 %v1498, 0.0
      %v1597 = vmax.f32 %v1503, 0.0
      %v1598 = vmax.f32 %v1508, 0.0
      %v1599 = vmax.f32 %v1513, 0.0
      %v1600 = vmax.f32 %v1518, 0.0
      %v1601 = vmax.f32 %v1523, 0.0
      %v1602 = vmax.f32 %v1528, 0.0
      %v1603 = vmax.f32 %v1533, 0.0
      %v1604 = vmax.f32 %v1538, 0.0
      %1605 = vst.msk [vmem:[%s226] sm:$0xff] %vm959, %v1541
      %1606 = vst.msk [vmem:[%s226 + $0x8] sm:$0xff] %vm959, %v1542
      %1607 = vst.msk [vmem:[%s226 + $0x10] sm:$0xff] %vm959, %v1543
      %1608 = vst.msk [vmem:[%s226 + $0x18] sm:$0xff] %vm959, %v1544
      %1609 = vst.msk [vmem:[%s226 + $0x20] sm:$0xff] %vm959, %v1545
      %1610 = vst.msk [vmem:[%s226 + $0x28] sm:$0xff] %vm959, %v1546
      %1611 = vst.msk [vmem:[%s226 + $0x30] sm:$0xff] %vm959, %v1547
      %1612 = vst.msk [vmem:[%s226 + $0x38] sm:$0xff] %vm959, %v1548
      %1613 = vst.msk [vmem:[%s226 + $0x40] sm:$0xff] %vm959, %v1549
      %1614 = vst.msk [vmem:[%s226 + $0x48] sm:$0xff] %vm959, %v1550
      %1615 = vst.msk [vmem:[%s226 + $0x50] sm:$0xff] %vm959, %v1551
      %1616 = vst.msk [vmem:[%s226 + $0x58] sm:$0xff] %vm959, %v1552
      %1617 = vst.msk [vmem:[%s226 + $0x60] sm:$0xff] %vm959, %v1553
      %1618 = vst.msk [vmem:[%s226 + $0x68] sm:$0xff] %vm959, %v1554
      %1619 = vst.msk [vmem:[%s226 + $0x70] sm:$0xff] %vm959, %v1555
      %1620 = vst.msk [vmem:[%s226 + $0x78] sm:$0xff] %vm959, %v1556
      %1621 = vst.msk [vmem:[%s226 + $0x80] sm:$0xff] %vm959, %v1557
      %1622 = vst.msk [vmem:[%s226 + $0x88] sm:$0xff] %vm959, %v1558
      %1623 = vst.msk [vmem:[%s226 + $0x90] sm:$0xff] %vm959, %v1559
      %1624 = vst.msk [vmem:[%s226 + $0x98] sm:$0xff] %vm959, %v1560
      %1625 = vst.msk [vmem:[%s226 + $0xa0] sm:$0xff] %vm959, %v1561
      %1626 = vst.msk [vmem:[%s226 + $0xa8] sm:$0xff] %vm959, %v1562
      %1627 = vst.msk [vmem:[%s226 + $0xb0] sm:$0xff] %vm959, %v1563
      %1628 = vst.msk [vmem:[%s226 + $0xb8] sm:$0xff] %vm959, %v1564
      %1629 = vst.msk [vmem:[%s226 + $0xc0] sm:$0xff] %vm959, %v1565
      %1630 = vst.msk [vmem:[%s226 + $0xc8] sm:$0xff] %vm959, %v1566
      %1631 = vst.msk [vmem:[%s226 + $0xd0] sm:$0xff] %vm959, %v1567
      %1632 = vst.msk [vmem:[%s226 + $0xd8] sm:$0xff] %vm959, %v1568
      %1633 = vst.msk [vmem:[%s226 + $0xe0] sm:$0xff] %vm959, %v1569
      %1634 = vst.msk [vmem:[%s226 + $0xe8] sm:$0xff] %vm959, %v1570
      %1635 = vst.msk [vmem:[%s226 + $0xf0] sm:$0xff] %vm959, %v1571
      %1636 = vst.msk [vmem:[%s226 + $0xf8] sm:$0xff] %vm959, %v1572
      %1637 = vst.msk [vmem:[%s226 + $0x100] sm:$0xff] %vm959, %v1573
      %1638 = vst.msk [vmem:[%s226 + $0x108] sm:$0xff] %vm959, %v1574
      %1639 = vst.msk [vmem:[%s226 + $0x110] sm:$0xff] %vm959, %v1575
      %1640 = vst.msk [vmem:[%s226 + $0x118] sm:$0xff] %vm959, %v1576
      %1641 = vst.msk [vmem:[%s226 + $0x120] sm:$0xff] %vm959, %v1577
      %1642 = vst.msk [vmem:[%s226 + $0x128] sm:$0xff] %vm959, %v1578
      %1643 = vst.msk [vmem:[%s226 + $0x130] sm:$0xff] %vm959, %v1579
      %1644 = vst.msk [vmem:[%s226 + $0x138] sm:$0xff] %vm959, %v1580
      %1645 = vst.msk [vmem:[%s226 + $0x140] sm:$0xff] %vm959, %v1581
      %1646 = vst.msk [vmem:[%s226 + $0x148] sm:$0xff] %vm959, %v1582
      %1647 = vst.msk [vmem:[%s226 + $0x150] sm:$0xff] %vm959, %v1583
      %1648 = vst.msk [vmem:[%s226 + $0x158] sm:$0xff] %vm959, %v1584
      %1649 = vst.msk [vmem:[%s226 + $0x160] sm:$0xff] %vm959, %v1585
      %1650 = vst.msk [vmem:[%s226 + $0x168] sm:$0xff] %vm959, %v1586
      %1651 = vst.msk [vmem:[%s226 + $0x170] sm:$0xff] %vm959, %v1587
      %1652 = vst.msk [vmem:[%s226 + $0x178] sm:$0xff] %vm959, %v1588
      %1653 = vst.msk [vmem:[%s226 + $0x180] sm:$0xff] %vm959, %v1589
      %1654 = vst.msk [vmem:[%s226 + $0x188] sm:$0xff] %vm959, %v1590
      %1655 = vst.msk [vmem:[%s226 + $0x190] sm:$0xff] %vm959, %v1591
      %1656 = vst.msk [vmem:[%s226 + $0x198] sm:$0xff] %vm959, %v1592
      %1657 = vst.msk [vmem:[%s226 + $0x1a0] sm:$0xff] %vm959, %v1593
      %1658 = vst.msk [vmem:[%s226 + $0x1a8] sm:$0xff] %vm959, %v1594
      %1659 = vst.msk [vmem:[%s226 + $0x1b0] sm:$0xff] %vm959, %v1595
      %1660 = vst.msk [vmem:[%s226 + $0x1b8] sm:$0xff] %vm959, %v1596
      %1661 = vst.msk [vmem:[%s226 + $0x1c0] sm:$0xff] %vm959, %v1597
      %1662 = vst.msk [vmem:[%s226 + $0x1c8] sm:$0xff] %vm959, %v1598
      %1663 = vst.msk [vmem:[%s226 + $0x1d0] sm:$0xff] %vm959, %v1599
      %1664 = vst.msk [vmem:[%s226 + $0x1d8] sm:$0xff] %vm959, %v1600
      %1665 = vst.msk [vmem:[%s226 + $0x1e0] sm:$0xff] %vm959, %v1601
      %1666 = vst.msk [vmem:[%s226 + $0x1e8] sm:$0xff] %vm959, %v1602
      %1667 = vst.msk [vmem:[%s226 + $0x1f0] sm:$0xff] %vm959, %v1603
      %1668 = vst.msk [vmem:[%s226 + $0x1f8] sm:$0xff] %vm959, %v1604
      %s1669 = smul.u32 64, %s16
      %p1670 = scmp.lt.s32.totalorder %s1669, 255
      %s1671 = scalar_select %p1670, %s1669, 255
      %s1672 = smul.addr %s1671, 8
      %s1673 = scalar_lea.vmem %s5, %s1672
      // Predicated region
      $region41: #{tpu_custom_call.1} parent=39 // pred_check
        %p1674 = pneg %p144
      $region42: #{tpu_custom_call.1} parent=39 // pred_check_branch
        %1676 = sbr.rel (%p1674) target = $region44
      $region43: #{tpu_custom_call.1} parent=39 // pred_region
        %s1677 = smul.u32 64, %s16
      $region44: #{tpu_custom_call.1} parent=39 // pred_fallthru
        _
    $region40: #{tpu_custom_call.1} parent=5 // pred_fallthru
      _
    %p1678 = scmp.le.s32.totalorder 2, %s11
    // Predicated region
    $region45: #{tpu_custom_call.1} parent=5 // pred_check
      %p1679 = pneg %p1678
    $region46: #{tpu_custom_call.1} parent=5 // pred_check_branch
      %1681 = sbr.rel (%p1679) target = $region48
    $region47: #{tpu_custom_call.1} parent=5 // pred_region
      %s1682 = ssub.s32 %s11, 2
      // Predicated region
      $region49: #{tpu_custom_call.1} parent=47 // pred_check
        %p1683 = pneg %p150
      $region50: #{tpu_custom_call.1} parent=47 // pred_check_branch
        %1685 = sbr.rel (%p1683) target = $region52
      $region51: #{tpu_custom_call.1} parent=47 // pred_region
        %s1686 = smul.u32 64, %s17
        %p1687 = scmp.lt.s32.totalorder %s1686, 255
        %s1688 = scalar_select %p1687, %s1686, 255
        %s1689 = smul.addr %s1688, 8
        %s1690 = scalar_lea.vmem %s5, %s1689
      $region52: #{tpu_custom_call.1} parent=47 // pred_fallthru
        _
    $region48: #{tpu_custom_call.1} parent=5 // pred_fallthru
      _
  $region6: #{tpu_custom_call.1} parent=0 // loop_footer
    %s15 = sadd.s32 1, %s11
  $region7: #{tpu_custom_call.1} parent=0 // loop_footer_branch
    %10 = sbr.rel target = $region3
  $region8: #{tpu_custom_call.1} parent=0 // loop_exit
    _

</llo_original>
